<compile_context>
chip_gen: v7x
topology: tpu7x:2x2x1
jax: 0.10.0
libtpu: 0.0.40
codegen_flags: <defaults>
</compile_context>

<pallas_src>
import jax
import jax.numpy as jnp
from jax.experimental import pallas as pl
from jax.experimental.pallas import tpu as pltpu

HIDDEN = 32           # hidden_dim
N_PRED = 6            # n_pred  (60 * n_pred == 360 required by the .view in forward)
D_IN = 2 * HIDDEN     # concat([anchors, agent_emb]) -> MultiModalAnchors linear input
D_FC1 = 256           # MLP head intermediate width
D_OUT = 60 * N_PRED   # 360
D_OUT_PAD = 384       # 3 * 128 lane-dense padded output width
TM_AGENT = 256        # agent-row tile per grid step (tunable; 256 agents = 1536 rows)


def _round_up(x, m):
    return ((x + m - 1) // m) * m


def _decoder_kernel(valid_ref, emb_ref, w_emb_ref, anc_ref, b1_ref, w2_ref, b2_ref,
                    out_ref):
    """Fused (folded) MultiModalAnchors-linear + MLP head for TM_AGENT agents.

    valid_ref: [TM, 1]        f32, 1.0 where agent valid else 0.0
    emb_ref:   [TM, 32]       bf16 agent embeddings
    w_emb_ref: [32, 256]      bf16, emb half of folded (wa @ w1)
    anc_ref:   [6, 256]       f32, anchors @ (anchor half of wa@w1) + ba@w1
    b1_ref:    [1, 256]       f32
    w2_ref:    [256, 384]     bf16, fc2 weights (columns reordered + zero-padded)
    b2_ref:    [1, 384]       f32
    out_ref:   [TM, 6, 384]   f32
    """
    emb_part = jnp.dot(emb_ref[...], w_emb_ref[...],
                       preferred_element_type=jnp.float32)        # [TM, 256]
    valid = valid_ref[...]
    b1 = b1_ref[...]
    w2 = w2_ref[...]
    b2 = b2_ref[...]
    # Static unroll over the 6 prediction modes; each iteration is one lane-dense
    # [TM,256] x [256,384] MXU matmul and an unmasked [TM,384] store.
    for p in range(N_PRED):
        h1 = valid * (emb_part + anc_ref[p:p + 1, :]) + b1        # fold is exact
        h1 = jnp.maximum(h1, 0.0)
        h2 = jnp.dot(h1.astype(jnp.bfloat16), w2,
                     preferred_element_type=jnp.float32) + b2
        out_ref[:, p, :] = jnp.maximum(h2, 0.0)


def _run_pallas(valid, emb, kw, tm_a):
    b_pad = valid.shape[0]
    grid = (b_pad // tm_a,)
    tile = lambda i: (i, 0)
    tile3 = lambda i: (i, 0, 0)
    full = lambda i: (0, 0)
    return pl.pallas_call(
        _decoder_kernel,
        out_shape=jax.ShapeDtypeStruct((b_pad, N_PRED, D_OUT_PAD), jnp.float32),
        grid_spec=pltpu.PrefetchScalarGridSpec(
            num_scalar_prefetch=0,
            grid=grid,
            in_specs=[
                pl.BlockSpec((tm_a, 1), tile),            # valid
                pl.BlockSpec((tm_a, HIDDEN), tile),       # agent_emb (bf16)
                pl.BlockSpec((HIDDEN, D_FC1), full),      # folded emb weight
                pl.BlockSpec((N_PRED, D_FC1), full),      # per-pred anchor term
                pl.BlockSpec((1, D_FC1), full),           # b1
                pl.BlockSpec((D_FC1, D_OUT_PAD), full),   # fc2 W (reordered, padded)
                pl.BlockSpec((1, D_OUT_PAD), full),       # fc2 b (reordered, padded)
            ],
            out_specs=pl.BlockSpec((tm_a, N_PRED, D_OUT_PAD), tile3),
        ),
        compiler_params=pltpu.CompilerParams(dimension_semantics=("parallel",)),
    )(valid, emb, kw["w_emb"], kw["anc_term"], kw["b1"], kw["w2"], kw["b2"])


def _prepare_kernel_weights(params):
    """Fold anchor-linear into fc1, reorder/pad fc2, cast matmul operands to bf16."""
    w_fold = params["wa"] @ params["w1"]                  # [64, 256]
    ba_w1 = params["ba"] @ params["w1"]                   # [1, 256]
    w_anchor = w_fold[:HIDDEN]                            # anchors half
    w_emb = w_fold[HIDDEN:]                               # emb half
    anc_term = params["anchors"] @ w_anchor + ba_w1       # [6, 256]
    # Column permutation: pred (orig 1..359) first, conf (orig 0) at col 359,
    # then zero-pad to 384 lanes.
    w2 = jnp.concatenate([params["w2"][:, 1:], params["w2"][:, :1]], axis=1)
    b2 = jnp.concatenate([params["b2"][:, 1:], params["b2"][:, :1]], axis=1)
    w2 = jnp.pad(w2, ((0, 0), (0, D_OUT_PAD - D_OUT)))
    b2 = jnp.pad(b2, ((0, 0), (0, D_OUT_PAD - D_OUT)))
    return {
        "w_emb": w_emb.astype(jnp.bfloat16),
        "anc_term": anc_term.astype(jnp.float32),
        "b1": params["b1"].astype(jnp.float32),
        "w2": w2.astype(jnp.bfloat16),
        "b2": b2.astype(jnp.float32),
    }


def init_params(key):
    ks = jax.random.split(key, 5)
    scale = 0.05
    return {
        "anchors": scale * jax.random.normal(ks[0], (N_PRED, HIDDEN), jnp.float32),
        "wa": scale * jax.random.normal(ks[1], (D_IN, HIDDEN), jnp.float32),
        "ba": jnp.zeros((1, HIDDEN), jnp.float32),
        "w1": scale * jax.random.normal(ks[2], (HIDDEN, D_FC1), jnp.float32),
        "b1": 0.01 * jnp.ones((1, D_FC1), jnp.float32),
        "w2": scale * jax.random.normal(ks[3], (D_FC1, D_OUT), jnp.float32),
        "b2": 0.01 * jnp.ones((1, D_OUT), jnp.float32),
    }


@jax.jit
def decoder_forward(agent_type, agent_valid, agent_attr, agent_emb, params):
    """Returns (conf, pred) exactly like Decoder.forward with the synthetic config.

    agent_type:  [n_scene, n_agent, 3]  (unused: use_agent_type=False)
    agent_valid: [n_scene, n_agent] bool
    agent_attr:  [n_scene, n_agent, agent_attr_dim] (unused: use_attr_for_multi_modal=False)
    agent_emb:   [n_scene, n_agent, hidden_dim]
    """
    del agent_type, agent_attr  # unused in this configuration
    n_scene, n_agent = agent_valid.shape
    B = n_scene * n_agent

    kw = _prepare_kernel_weights(params)

    # Agent-row tile (multiple of 16 for bf16 sublane packing); pad rows to it.
    tm_a = min(TM_AGENT, _round_up(B, 16))
    b_pad = _round_up(B, tm_a)

    emb = agent_emb.reshape(B, HIDDEN).astype(jnp.bfloat16)
    valid = agent_valid.reshape(B, 1).astype(jnp.float32)
    emb = jnp.pad(emb, ((0, b_pad - B), (0, 0)))
    valid = jnp.pad(valid, ((0, b_pad - B), (0, 0)))

    out = _run_pallas(valid, emb, kw, tm_a)[:B]                    # [B, 6, 384]
    out = out.reshape(n_scene, n_agent, N_PRED, D_OUT_PAD)
    conf = out[..., D_OUT - 1]       # conf lives at reordered col 359
    pred = out[..., :D_OUT - 1]      # pred = original cols 1..359 (aligned prefix)
    return conf, pred


def _reference_forward(agent_valid, agent_emb, params):
    """Pure-JAX f32 reference of the original (unfused) computation."""
    n_scene, n_agent = agent_valid.shape
    B = n_scene * n_agent
    emb = agent_emb.reshape(B, HIDDEN)
    anc = jnp.broadcast_to(params["anchors"][None], (B, N_PRED, HIDDEN))
    emb_b = jnp.broadcast_to(emb[:, None, :], (B, N_PRED, HIDDEN))
    x = jnp.concatenate([anc, emb_b], axis=-1)
    h0 = x @ params["wa"] + params["ba"]
    h0 = h0 * agent_valid.reshape(B, 1, 1).astype(jnp.float32)
    h1 = jnp.maximum(h0 @ params["w1"] + params["b1"], 0.0)
    h2 = jnp.maximum(h1 @ params["w2"] + params["b2"], 0.0)
    output = h2.reshape(n_scene, n_agent, N_PRED, D_OUT)
    return output[..., 0], output[..., 1:]


if __name__ == "__main__":
    key = jax.random.PRNGKey(0)
    k_p, k_emb, k_attr, k_typ, k_val = jax.random.split(key, 5)

    n_scene, n_agent, agent_attr_dim = 2, 4, 24
    params = init_params(k_p)

    agent_emb = jax.random.normal(k_emb, (n_scene, n_agent, HIDDEN), jnp.float32)
    agent_attr = jax.random.normal(k_attr, (n_scene, n_agent, agent_attr_dim), jnp.float32)
    agent_type = jax.nn.one_hot(
        jax.random.randint(k_typ, (n_scene, n_agent), 0, 3), 3, dtype=jnp.float32)
    agent_valid = jax.random.bernoulli(k_val, 0.8, (n_scene, n_agent))

    conf, pred = decoder_forward(agent_type, agent_valid, agent_attr, agent_emb, params)
    conf, pred = jax.block_until_ready((conf, pred))

    conf_ref, pred_ref = _reference_forward(agent_valid, agent_emb, params)
    assert conf.shape == (n_scene, n_agent, N_PRED)
    assert pred.shape == (n_scene, n_agent, N_PRED, D_OUT - 1)
    # bf16 matmul operands with f32 accumulation -> relaxed tolerance vs f32 reference.
    assert jnp.allclose(conf, conf_ref, atol=1e-2, rtol=1e-2)
    assert jnp.allclose(pred, pred_ref, atol=1e-2, rtol=1e-2)

    print("KERNEL_OK")
</pallas_src>

<mosaic_0001>
module attributes {stable_mosaic.version = 11 : i64} {
  func.func @_decoder_kernel(%arg0: i32, %arg1: memref<16x1xf32, #tpu.memory_space<vmem>>, %arg2: memref<16x32xbf16, #tpu.memory_space<vmem>>, %arg3: memref<32x256xbf16, #tpu.memory_space<vmem>>, %arg4: memref<6x256xf32, #tpu.memory_space<vmem>>, %arg5: memref<1x256xf32, #tpu.memory_space<vmem>>, %arg6: memref<256x384xbf16, #tpu.memory_space<vmem>>, %arg7: memref<1x384xf32, #tpu.memory_space<vmem>>, %arg8: memref<16x6x384xf32, #tpu.memory_space<vmem>>) attributes {dimension_semantics = [#tpu.dimension_semantics<parallel>], iteration_bounds = array<i64: 1>, scalar_prefetch = 0 : i64, scratch_operands = 0 : i64, tpu.core_type = #tpu.core_type<tc>, window_params = [{transform_indices = @transform_0, window_bounds = array<i64: 16, 1>}, {transform_indices = @transform_1, window_bounds = array<i64: 16, 32>}, {pipeline_mode = #tpu.pipeline_mode<synchronous>, transform_indices = @transform_2, window_bounds = array<i64: 32, 256>}, {pipeline_mode = #tpu.pipeline_mode<synchronous>, transform_indices = @transform_3, window_bounds = array<i64: 6, 256>}, {pipeline_mode = #tpu.pipeline_mode<synchronous>, transform_indices = @transform_4, window_bounds = array<i64: 1, 256>}, {pipeline_mode = #tpu.pipeline_mode<synchronous>, transform_indices = @transform_5, window_bounds = array<i64: 256, 384>}, {pipeline_mode = #tpu.pipeline_mode<synchronous>, transform_indices = @transform_6, window_bounds = array<i64: 1, 384>}, {transform_indices = @transform_7, window_bounds = array<i64: 16, 6, 384>}]} {
    %c0 = arith.constant 0 : index
    %c0_0 = arith.constant 0 : index
    %0 = vector.load %arg2[%c0, %c0_0] : memref<16x32xbf16, #tpu.memory_space<vmem>>, vector<16x32xbf16>
    %c0_1 = arith.constant 0 : index
    %c0_2 = arith.constant 0 : index
    %1 = vector.load %arg3[%c0_1, %c0_2] : memref<32x256xbf16, #tpu.memory_space<vmem>>, vector<32x256xbf16>
    %cst = arith.constant dense<0.000000e+00> : vector<16x256xf32>
    %2 = tpu.matmul %0, %1, %cst {dimension_numbers = #tpu.dot_dimension_numbers<[1], [0], [0], [1], [0, 0, 1, 1], [], []>} : vector<16x32xbf16>, vector<32x256xbf16>, vector<16x256xf32> -> vector<16x256xf32>
    %c0_3 = arith.constant 0 : index
    %c0_4 = arith.constant 0 : index
    %3 = vector.load %arg1[%c0_3, %c0_4] : memref<16x1xf32, #tpu.memory_space<vmem>>, vector<16x1xf32>
    %c0_5 = arith.constant 0 : index
    %c0_6 = arith.constant 0 : index
    %4 = vector.load %arg5[%c0_5, %c0_6] : memref<1x256xf32, #tpu.memory_space<vmem>>, vector<1x256xf32>
    %c0_7 = arith.constant 0 : index
    %c0_8 = arith.constant 0 : index
    %5 = vector.load %arg6[%c0_7, %c0_8] : memref<256x384xbf16, #tpu.memory_space<vmem>>, vector<256x384xbf16>
    %c0_9 = arith.constant 0 : index
    %c0_10 = arith.constant 0 : index
    %6 = vector.load %arg7[%c0_9, %c0_10] : memref<1x384xf32, #tpu.memory_space<vmem>>, vector<1x384xf32>
    %c0_11 = arith.constant 0 : index
    %c0_12 = arith.constant 0 : index
    %7 = vector.load %arg4[%c0_11, %c0_12] : memref<6x256xf32, #tpu.memory_space<vmem>>, vector<1x256xf32>
    %8 = vector.broadcast %7 : vector<1x256xf32> to vector<16x256xf32>
    %9 = arith.addf %2, %8 : vector<16x256xf32>
    %10 = vector.broadcast %3 : vector<16x1xf32> to vector<16x256xf32>
    %11 = arith.mulf %10, %9 : vector<16x256xf32>
    %12 = vector.broadcast %4 : vector<1x256xf32> to vector<16x256xf32>
    %13 = arith.addf %11, %12 : vector<16x256xf32>
    %cst_13 = arith.constant 0.000000e+00 : f32
    %14 = vector.broadcast %cst_13 : f32 to vector<16x256xf32>
    %15 = arith.maximumf %13, %14 : vector<16x256xf32>
    %16 = arith.truncf %15 : vector<16x256xf32> to vector<16x256xbf16>
    %cst_14 = arith.constant dense<0.000000e+00> : vector<16x384xf32>
    %17 = tpu.matmul %16, %5, %cst_14 {dimension_numbers = #tpu.dot_dimension_numbers<[1], [0], [0], [1], [0, 0, 1, 1], [], []>} : vector<16x256xbf16>, vector<256x384xbf16>, vector<16x384xf32> -> vector<16x384xf32>
    %18 = vector.broadcast %6 : vector<1x384xf32> to vector<16x384xf32>
    %19 = arith.addf %17, %18 : vector<16x384xf32>
    %cst_15 = arith.constant 0.000000e+00 : f32
    %20 = vector.broadcast %cst_15 : f32 to vector<16x384xf32>
    %21 = arith.maximumf %19, %20 : vector<16x384xf32>
    %c0_16 = arith.constant 0 : index
    %c0_17 = arith.constant 0 : index
    %c0_18 = arith.constant 0 : index
    %22 = vector.load %arg8[%c0_16, %c0_17, %c0_18] : memref<16x6x384xf32, #tpu.memory_space<vmem>>, vector<16x1x384xf32>
    %23 = vector.shape_cast %22 : vector<16x1x384xf32> to vector<16x384xf32>
    %24 = vector.shape_cast %21 : vector<16x384xf32> to vector<16x1x384xf32>
    tpu.vector_store %arg8[%c0_16, %c0_17, %c0_18], %24 {strides = array<i32>} : memref<16x6x384xf32, #tpu.memory_space<vmem>>, vector<16x1x384xf32>,
    %c1 = arith.constant 1 : index
    %c0_19 = arith.constant 0 : index
    %25 = vector.load %arg4[%c1, %c0_19] : memref<6x256xf32, #tpu.memory_space<vmem>>, vector<1x256xf32>
    %26 = vector.broadcast %25 : vector<1x256xf32> to vector<16x256xf32>
    %27 = arith.addf %2, %26 : vector<16x256xf32>
    %28 = vector.broadcast %3 : vector<16x1xf32> to vector<16x256xf32>
    %29 = arith.mulf %28, %27 : vector<16x256xf32>
    %30 = vector.broadcast %4 : vector<1x256xf32> to vector<16x256xf32>
    %31 = arith.addf %29, %30 : vector<16x256xf32>
    %cst_20 = arith.constant 0.000000e+00 : f32
    %32 = vector.broadcast %cst_20 : f32 to vector<16x256xf32>
    %33 = arith.maximumf %31, %32 : vector<16x256xf32>
    %34 = arith.truncf %33 : vector<16x256xf32> to vector<16x256xbf16>
    %cst_21 = arith.constant dense<0.000000e+00> : vector<16x384xf32>
    %35 = tpu.matmul %34, %5, %cst_21 {dimension_numbers = #tpu.dot_dimension_numbers<[1], [0], [0], [1], [0, 0, 1, 1], [], []>} : vector<16x256xbf16>, vector<256x384xbf16>, vector<16x384xf32> -> vector<16x384xf32>
    %36 = vector.broadcast %6 : vector<1x384xf32> to vector<16x384xf32>
    %37 = arith.addf %35, %36 : vector<16x384xf32>
    %cst_22 = arith.constant 0.000000e+00 : f32
    %38 = vector.broadcast %cst_22 : f32 to vector<16x384xf32>
    %39 = arith.maximumf %37, %38 : vector<16x384xf32>
    %c0_23 = arith.constant 0 : index
    %c1_24 = arith.constant 1 : index
    %c0_25 = arith.constant 0 : index
    %40 = vector.load %arg8[%c0_23, %c1_24, %c0_25] : memref<16x6x384xf32, #tpu.memory_space<vmem>>, vector<16x1x384xf32>
    %41 = vector.shape_cast %40 : vector<16x1x384xf32> to vector<16x384xf32>
    %42 = vector.shape_cast %39 : vector<16x384xf32> to vector<16x1x384xf32>
    tpu.vector_store %arg8[%c0_23, %c1_24, %c0_25], %42 {strides = array<i32>} : memref<16x6x384xf32, #tpu.memory_space<vmem>>, vector<16x1x384xf32>,
    %c2 = arith.constant 2 : index
    %c0_26 = arith.constant 0 : index
    %43 = vector.load %arg4[%c2, %c0_26] : memref<6x256xf32, #tpu.memory_space<vmem>>, vector<1x256xf32>
    %44 = vector.broadcast %43 : vector<1x256xf32> to vector<16x256xf32>
    %45 = arith.addf %2, %44 : vector<16x256xf32>
    %46 = vector.broadcast %3 : vector<16x1xf32> to vector<16x256xf32>
    %47 = arith.mulf %46, %45 : vector<16x256xf32>
    %48 = vector.broadcast %4 : vector<1x256xf32> to vector<16x256xf32>
    %49 = arith.addf %47, %48 : vector<16x256xf32>
    %cst_27 = arith.constant 0.000000e+00 : f32
    %50 = vector.broadcast %cst_27 : f32 to vector<16x256xf32>
    %51 = arith.maximumf %49, %50 : vector<16x256xf32>
    %52 = arith.truncf %51 : vector<16x256xf32> to vector<16x256xbf16>
    %cst_28 = arith.constant dense<0.000000e+00> : vector<16x384xf32>
    %53 = tpu.matmul %52, %5, %cst_28 {dimension_numbers = #tpu.dot_dimension_numbers<[1], [0], [0], [1], [0, 0, 1, 1], [], []>} : vector<16x256xbf16>, vector<256x384xbf16>, vector<16x384xf32> -> vector<16x384xf32>
    %54 = vector.broadcast %6 : vector<1x384xf32> to vector<16x384xf32>
    %55 = arith.addf %53, %54 : vector<16x384xf32>
    %cst_29 = arith.constant 0.000000e+00 : f32
    %56 = vector.broadcast %cst_29 : f32 to vector<16x384xf32>
    %57 = arith.maximumf %55, %56 : vector<16x384xf32>
    %c0_30 = arith.constant 0 : index
    %c2_31 = arith.constant 2 : index
    %c0_32 = arith.constant 0 : index
    %58 = vector.load %arg8[%c0_30, %c2_31, %c0_32] : memref<16x6x384xf32, #tpu.memory_space<vmem>>, vector<16x1x384xf32>
    %59 = vector.shape_cast %58 : vector<16x1x384xf32> to vector<16x384xf32>
    %60 = vector.shape_cast %57 : vector<16x384xf32> to vector<16x1x384xf32>
    tpu.vector_store %arg8[%c0_30, %c2_31, %c0_32], %60 {strides = array<i32>} : memref<16x6x384xf32, #tpu.memory_space<vmem>>, vector<16x1x384xf32>,
    %c3 = arith.constant 3 : index
    %c0_33 = arith.constant 0 : index
    %61 = vector.load %arg4[%c3, %c0_33] : memref<6x256xf32, #tpu.memory_space<vmem>>, vector<1x256xf32>
    %62 = vector.broadcast %61 : vector<1x256xf32> to vector<16x256xf32>
    %63 = arith.addf %2, %62 : vector<16x256xf32>
    %64 = vector.broadcast %3 : vector<16x1xf32> to vector<16x256xf32>
    %65 = arith.mulf %64, %63 : vector<16x256xf32>
    %66 = vector.broadcast %4 : vector<1x256xf32> to vector<16x256xf32>
    %67 = arith.addf %65, %66 : vector<16x256xf32>
    %cst_34 = arith.constant 0.000000e+00 : f32
    %68 = vector.broadcast %cst_34 : f32 to vector<16x256xf32>
    %69 = arith.maximumf %67, %68 : vector<16x256xf32>
    %70 = arith.truncf %69 : vector<16x256xf32> to vector<16x256xbf16>
    %cst_35 = arith.constant dense<0.000000e+00> : vector<16x384xf32>
    %71 = tpu.matmul %70, %5, %cst_35 {dimension_numbers = #tpu.dot_dimension_numbers<[1], [0], [0], [1], [0, 0, 1, 1], [], []>} : vector<16x256xbf16>, vector<256x384xbf16>, vector<16x384xf32> -> vector<16x384xf32>
    %72 = vector.broadcast %6 : vector<1x384xf32> to vector<16x384xf32>
    %73 = arith.addf %71, %72 : vector<16x384xf32>
    %cst_36 = arith.constant 0.000000e+00 : f32
    %74 = vector.broadcast %cst_36 : f32 to vector<16x384xf32>
    %75 = arith.maximumf %73, %74 : vector<16x384xf32>
    %c0_37 = arith.constant 0 : index
    %c3_38 = arith.constant 3 : index
    %c0_39 = arith.constant 0 : index
    %76 = vector.load %arg8[%c0_37, %c3_38, %c0_39] : memref<16x6x384xf32, #tpu.memory_space<vmem>>, vector<16x1x384xf32>
    %77 = vector.shape_cast %76 : vector<16x1x384xf32> to vector<16x384xf32>
    %78 = vector.shape_cast %75 : vector<16x384xf32> to vector<16x1x384xf32>
    tpu.vector_store %arg8[%c0_37, %c3_38, %c0_39], %78 {strides = array<i32>} : memref<16x6x384xf32, #tpu.memory_space<vmem>>, vector<16x1x384xf32>,
    %c4 = arith.constant 4 : index
    %c0_40 = arith.constant 0 : index
    %79 = vector.load %arg4[%c4, %c0_40] : memref<6x256xf32, #tpu.memory_space<vmem>>, vector<1x256xf32>
    %80 = vector.broadcast %79 : vector<1x256xf32> to vector<16x256xf32>
    %81 = arith.addf %2, %80 : vector<16x256xf32>
    %82 = vector.broadcast %3 : vector<16x1xf32> to vector<16x256xf32>
    %83 = arith.mulf %82, %81 : vector<16x256xf32>
    %84 = vector.broadcast %4 : vector<1x256xf32> to vector<16x256xf32>
    %85 = arith.addf %83, %84 : vector<16x256xf32>
    %cst_41 = arith.constant 0.000000e+00 : f32
    %86 = vector.broadcast %cst_41 : f32 to vector<16x256xf32>
    %87 = arith.maximumf %85, %86 : vector<16x256xf32>
    %88 = arith.truncf %87 : vector<16x256xf32> to vector<16x256xbf16>
    %cst_42 = arith.constant dense<0.000000e+00> : vector<16x384xf32>
    %89 = tpu.matmul %88, %5, %cst_42 {dimension_numbers = #tpu.dot_dimension_numbers<[1], [0], [0], [1], [0, 0, 1, 1], [], []>} : vector<16x256xbf16>, vector<256x384xbf16>, vector<16x384xf32> -> vector<16x384xf32>
    %90 = vector.broadcast %6 : vector<1x384xf32> to vector<16x384xf32>
    %91 = arith.addf %89, %90 : vector<16x384xf32>
    %cst_43 = arith.constant 0.000000e+00 : f32
    %92 = vector.broadcast %cst_43 : f32 to vector<16x384xf32>
    %93 = arith.maximumf %91, %92 : vector<16x384xf32>
    %c0_44 = arith.constant 0 : index
    %c4_45 = arith.constant 4 : index
    %c0_46 = arith.constant 0 : index
    %94 = vector.load %arg8[%c0_44, %c4_45, %c0_46] : memref<16x6x384xf32, #tpu.memory_space<vmem>>, vector<16x1x384xf32>
    %95 = vector.shape_cast %94 : vector<16x1x384xf32> to vector<16x384xf32>
    %96 = vector.shape_cast %93 : vector<16x384xf32> to vector<16x1x384xf32>
    tpu.vector_store %arg8[%c0_44, %c4_45, %c0_46], %96 {strides = array<i32>} : memref<16x6x384xf32, #tpu.memory_space<vmem>>, vector<16x1x384xf32>,
    %c5 = arith.constant 5 : index
    %c0_47 = arith.constant 0 : index
    %97 = vector.load %arg4[%c5, %c0_47] : memref<6x256xf32, #tpu.memory_space<vmem>>, vector<1x256xf32>
    %98 = vector.broadcast %97 : vector<1x256xf32> to vector<16x256xf32>
    %99 = arith.addf %2, %98 : vector<16x256xf32>
    %100 = vector.broadcast %3 : vector<16x1xf32> to vector<16x256xf32>
    %101 = arith.mulf %100, %99 : vector<16x256xf32>
    %102 = vector.broadcast %4 : vector<1x256xf32> to vector<16x256xf32>
    %103 = arith.addf %101, %102 : vector<16x256xf32>
    %cst_48 = arith.constant 0.000000e+00 : f32
    %104 = vector.broadcast %cst_48 : f32 to vector<16x256xf32>
    %105 = arith.maximumf %103, %104 : vector<16x256xf32>
    %106 = arith.truncf %105 : vector<16x256xf32> to vector<16x256xbf16>
    %cst_49 = arith.constant dense<0.000000e+00> : vector<16x384xf32>
    %107 = tpu.matmul %106, %5, %cst_49 {dimension_numbers = #tpu.dot_dimension_numbers<[1], [0], [0], [1], [0, 0, 1, 1], [], []>} : vector<16x256xbf16>, vector<256x384xbf16>, vector<16x384xf32> -> vector<16x384xf32>
    %108 = vector.broadcast %6 : vector<1x384xf32> to vector<16x384xf32>
    %109 = arith.addf %107, %108 : vector<16x384xf32>
    %cst_50 = arith.constant 0.000000e+00 : f32
    %110 = vector.broadcast %cst_50 : f32 to vector<16x384xf32>
    %111 = arith.maximumf %109, %110 : vector<16x384xf32>
    %c0_51 = arith.constant 0 : index
    %c5_52 = arith.constant 5 : index
    %c0_53 = arith.constant 0 : index
    %112 = vector.load %arg8[%c0_51, %c5_52, %c0_53] : memref<16x6x384xf32, #tpu.memory_space<vmem>>, vector<16x1x384xf32>
    %113 = vector.shape_cast %112 : vector<16x1x384xf32> to vector<16x384xf32>
    %114 = vector.shape_cast %111 : vector<16x384xf32> to vector<16x1x384xf32>
    tpu.vector_store %arg8[%c0_51, %c5_52, %c0_53], %114 {strides = array<i32>} : memref<16x6x384xf32, #tpu.memory_space<vmem>>, vector<16x1x384xf32>,
    return
  }
  func.func @transform_0(%arg0: i32) -> (i32, i32) {
    %c0_i32 = arith.constant 0 : i32
    %c0_i32_0 = arith.constant 0 : i32
    return %arg0, %c0_i32 : i32, i32
  }
  func.func @transform_1(%arg0: i32) -> (i32, i32) {
    %c0_i32 = arith.constant 0 : i32
    %c0_i32_0 = arith.constant 0 : i32
    return %arg0, %c0_i32 : i32, i32
  }
  func.func @transform_2(%arg0: i32) -> (i32, i32) {
    %c0_i32 = arith.constant 0 : i32
    %c0_i32_0 = arith.constant 0 : i32
    %c0_i32_1 = arith.constant 0 : i32
    return %c0_i32, %c0_i32_0 : i32, i32
  }
  func.func @transform_3(%arg0: i32) -> (i32, i32) {
    %c0_i32 = arith.constant 0 : i32
    %c0_i32_0 = arith.constant 0 : i32
    %c0_i32_1 = arith.constant 0 : i32
    return %c0_i32, %c0_i32_0 : i32, i32
  }
  func.func @transform_4(%arg0: i32) -> (i32, i32) {
    %c0_i32 = arith.constant 0 : i32
    %c0_i32_0 = arith.constant 0 : i32
    %c0_i32_1 = arith.constant 0 : i32
    return %c0_i32, %c0_i32_0 : i32, i32
  }
  func.func @transform_5(%arg0: i32) -> (i32, i32) {
    %c0_i32 = arith.constant 0 : i32
    %c0_i32_0 = arith.constant 0 : i32
    %c0_i32_1 = arith.constant 0 : i32
    return %c0_i32, %c0_i32_0 : i32, i32
  }
  func.func @transform_6(%arg0: i32) -> (i32, i32) {
    %c0_i32 = arith.constant 0 : i32
    %c0_i32_0 = arith.constant 0 : i32
    %c0_i32_1 = arith.constant 0 : i32
    return %c0_i32, %c0_i32_0 : i32, i32
  }
  func.func @transform_7(%arg0: i32) -> (i32, i32, i32) {
    %c0_i32 = arith.constant 0 : i32
    %c0_i32_0 = arith.constant 0 : i32
    %c0_i32_1 = arith.constant 0 : i32
    return %arg0, %c0_i32, %c0_i32_0 : i32, i32, i32
  }
}

</mosaic_0001>

<llo_original>
// kernel: decoder_forward.1
$region0: #{decoder_forward.1}
  #allocation0 [shape = 'u32[]', space=smem, size = 0x4, offset = 0x4, fixed_abs, tag = 'smem constant byte address 0x4 - core index']
  #allocation1 [shape = 'u32[144,128]{1,0:T(1,128)}', space=vmem, size = 0x12000, scoped, tag = 'internal scratch']
  %s0 = inlined_call_operand.vmem [shape: f32[16,1], index: 0, kind: input, shape index: {}]
  %s1 = inlined_call_operand.vmem [shape: bf16[16,32], index: 1, kind: input, shape index: {}]
  %s2 = inlined_call_operand.vmem [shape: bf16[32,256], index: 2, kind: input, shape index: {}]
  %s3 = inlined_call_operand.vmem [shape: f32[6,256], index: 3, kind: input, shape index: {}]
  %s4 = inlined_call_operand.vmem [shape: f32[1,256], index: 4, kind: input, shape index: {}]
  %s5 = inlined_call_operand.vmem [shape: bf16[256,384], index: 5, kind: input, shape index: {}]
  %s6 = inlined_call_operand.vmem [shape: f32[1,384], index: 6, kind: input, shape index: {}]
  %s7 = inlined_call_operand.vmem [shape: f32[16,6,384], index: 7, kind: output, shape index: {}]
  %s8 = sld [smem:[#allocation0]]
  $region38: #{decoder_forward.1} parent=0
    _
  %s10 = ssub.s32 1, %s8
  %s11 = scalar_select 0, %s10, %s8
  // Predicated region
  $region2: #{decoder_forward.1} parent=0 // pred_check
    _
  $region3: #{decoder_forward.1} parent=0 // pred_check_branch
    %13 = sbr.rel (0) target = $region5
  $region4: #{decoder_forward.1} parent=0 // pred_region
    _
  $region5: #{decoder_forward.1} parent=0 // pred_fallthru
    _
  // Predicated region
  $region6: #{decoder_forward.1} parent=0 // pred_check
    _
  $region7: #{decoder_forward.1} parent=0 // pred_check_branch
    %15 = sbr.rel (0) target = $region9
  $region8: #{decoder_forward.1} parent=0 // pred_region
    _
  $region9: #{decoder_forward.1} parent=0 // pred_fallthru
    _
  // Predicated region
  $region10: #{decoder_forward.1} parent=0 // pred_check
    _
  $region11: #{decoder_forward.1} parent=0 // pred_check_branch
    %17 = sbr.rel (0) target = $region13
  $region12: #{decoder_forward.1} parent=0 // pred_region
    _
  $region13: #{decoder_forward.1} parent=0 // pred_fallthru
    _
  // Predicated region
  $region14: #{decoder_forward.1} parent=0 // pred_check
    _
  $region15: #{decoder_forward.1} parent=0 // pred_check_branch
    %19 = sbr.rel (0) target = $region17
  $region16: #{decoder_forward.1} parent=0 // pred_region
    _
  $region17: #{decoder_forward.1} parent=0 // pred_fallthru
    _
  // Predicated region
  $region18: #{decoder_forward.1} parent=0 // pred_check
    _
  $region19: #{decoder_forward.1} parent=0 // pred_check_branch
    %21 = sbr.rel (0) target = $region21
  $region20: #{decoder_forward.1} parent=0 // pred_region
    _
  $region21: #{decoder_forward.1} parent=0 // pred_fallthru
    _
  // Predicated region
  $region22: #{decoder_forward.1} parent=0 // pred_check
    _
  $region23: #{decoder_forward.1} parent=0 // pred_check_branch
    %23 = sbr.rel (0) target = $region25
  $region24: #{decoder_forward.1} parent=0 // pred_region
    _
  $region25: #{decoder_forward.1} parent=0 // pred_fallthru
    _
  // Predicated region
  $region26: #{decoder_forward.1} parent=0 // pred_check
    _
  $region27: #{decoder_forward.1} parent=0 // pred_check_branch
    %25 = sbr.rel (0) target = $region29
  $region28: #{decoder_forward.1} parent=0 // pred_region
    _
  $region29: #{decoder_forward.1} parent=0 // pred_fallthru
    _
  %v27 = vld [vmem:[%s1] sm:$0xf]
  %v28 = vld [vmem:[%s1 + $0x4] sm:$0xf]
  %v29 = vld [vmem:[%s2] sm:$0xff]
  %v30 = vld [vmem:[%s2 + $0x8] sm:$0xff]
  %v31 = vld [vmem:[%s2 + $0x10] sm:$0xff]
  %v32 = vld [vmem:[%s2 + $0x18] sm:$0xff]
  %v35 = vunpack.c.l.b16 %v27
  %v36 = vunpack.c.l.b16 %v28
  %v37 = vpack.c.b16 %v36, %v35
  %v42 = vunpack.c.l.b16 %v29
  %v43 = vunpack.c.h.b16 %v29
  %v44 = vunpack.c.l.b16 %v30
  %v45 = vunpack.c.h.b16 %v30
  %v46 = vunpack.c.l.b16 %v31
  %v47 = vunpack.c.h.b16 %v31
  %v48 = vunpack.c.l.b16 %v32
  %v49 = vunpack.c.h.b16 %v32
  %v50 = vpack.c.b16 %v44, %v42
  %v51 = vpack.c.b16 %v45, %v43
  %v52 = vpack.c.b16 %v48, %v46
  %v53 = vpack.c.b16 %v49, %v47
  %vm58 = vcmask 261120
  %v60 = vsel %vm58, %v37, 0
  %62 = vmatprep.subr.bf16.mxu0 %v51
  %63 = vmatpush1.bf16.msra.mxu0 %v50
  %64 = vmatprep.subr.bf16.mxu0 %v53
  %65 = vmatpush1.bf16.msra.mxu0 %v52
  %66 = vmatprep.subr.bf16.mxu0 0
  %67 = vmatpush1.bf16.msra.mxu0 0
  %68 = vmatprep.subr.bf16.mxu0 0
  %69 = vmatpush1.bf16.msra.mxu0 0
  %70 = vmatprep.subr.bf16.mxu0 0
  %71 = vmatpush1.bf16.msra.mxu0 0
  %72 = vmatprep.subr.bf16.mxu0 0
  %73 = vmatpush1.bf16.msra.mxu0 0
  %74 = vmatprep.subr.bf16.mxu0 0
  %75 = vmatpush1.bf16.msra.mxu0 0
  %76 = vmatprep.subr.bf16.mxu0 0
  %77 = vmatpush1.bf16.msra.mxu0 0
  %78 = vmatprep.subr.bf16.mxu0 0
  %79 = vmatpush1.bf16.msra.mxu0 0
  %80 = vmatprep.subr.bf16.mxu0 0
  %81 = vmatpush1.bf16.msra.mxu0 0
  %82 = vmatprep.subr.bf16.mxu0 0
  %83 = vmatpush1.bf16.msra.mxu0 0
  %84 = vmatprep.subr.bf16.mxu0 0
  %85 = vmatpush1.bf16.msra.mxu0 0
  %86 = vmatprep.subr.bf16.mxu0 0
  %87 = vmatpush1.bf16.msra.mxu0 0
  %88 = vmatprep.subr.bf16.mxu0 0
  %89 = vmatpush1.bf16.msra.mxu0 0
  %90 = vmatprep.subr.bf16.mxu0 0
  %91 = vmatpush1.bf16.msra.mxu0 0
  %92 = vmatprep.subr.bf16.mxu0 0
  %93 = vmatpush1.bf16.msra.mxu0 0
  %94 = vmatprep.mubr.bf16.mxu0 0
  %95 = vmatmul.mubr.bf16.gmra.mrb[0].mxu0 %v60
  %v96 = vpop.f32.mrb[0].mxu0
  %v97 = vadd.f32 0.0, %v96
  %v98 = vpop.f32.mrb[0].mxu0
  %v99 = vadd.f32 0.0, %v98
  %v100 = vpop.f32.mrb[0].mxu0
  %v101 = vadd.f32 0.0, %v100
  %v102 = vpop.f32.mrb[0].mxu0
  %v103 = vadd.f32 0.0, %v102
  %104 = vdwg.mxu0
  %v105 = vld [vmem:[%s0] sm:$0xff]
  %v106 = vld [vmem:[%s0 + $0x8] sm:$0xff]
  %v107 = vld [vmem:[%s4] sm:$0x3]
  %v108 = vld [vmem:[%s5] sm:$0xff]
  %v109 = vld [vmem:[%s5 + $0x8] sm:$0xf]
  %v110 = vld [vmem:[%s5 + $0xc] sm:$0xff]
  %v111 = vld [vmem:[%s5 + $0x14] sm:$0xf]
  %v112 = vld [vmem:[%s5 + $0x18] sm:$0xff]
  %v113 = vld [vmem:[%s5 + $0x20] sm:$0xf]
  %v114 = vld [vmem:[%s5 + $0x24] sm:$0xff]
  %v115 = vld [vmem:[%s5 + $0x2c] sm:$0xf]
  %v116 = vld [vmem:[%s5 + $0x30] sm:$0xff]
  %v117 = vld [vmem:[%s5 + $0x38] sm:$0xf]
  %v118 = vld [vmem:[%s5 + $0x3c] sm:$0xff]
  %v119 = vld [vmem:[%s5 + $0x44] sm:$0xf]
  %v120 = vld [vmem:[%s5 + $0x48] sm:$0xff]
  %v121 = vld [vmem:[%s5 + $0x50] sm:$0xf]
  %v122 = vld [vmem:[%s5 + $0x54] sm:$0xff]
  %v123 = vld [vmem:[%s5 + $0x5c] sm:$0xf]
  %v124 = vld [vmem:[%s5 + $0x60] sm:$0xff]
  %v125 = vld [vmem:[%s5 + $0x68] sm:$0xf]
  %v126 = vld [vmem:[%s5 + $0x6c] sm:$0xff]
  %v127 = vld [vmem:[%s5 + $0x74] sm:$0xf]
  %v128 = vld [vmem:[%s5 + $0x78] sm:$0xff]
  %v129 = vld [vmem:[%s5 + $0x80] sm:$0xf]
  %v130 = vld [vmem:[%s5 + $0x84] sm:$0xff]
  %v131 = vld [vmem:[%s5 + $0x8c] sm:$0xf]
  %v132 = vld [vmem:[%s5 + $0x90] sm:$0xff]
  %v133 = vld [vmem:[%s5 + $0x98] sm:$0xf]
  %v134 = vld [vmem:[%s5 + $0x9c] sm:$0xff]
  %v135 = vld [vmem:[%s5 + $0xa4] sm:$0xf]
  %v136 = vld [vmem:[%s5 + $0xa8] sm:$0xff]
  %v137 = vld [vmem:[%s5 + $0xb0] sm:$0xf]
  %v138 = vld [vmem:[%s5 + $0xb4] sm:$0xff]
  %v139 = vld [vmem:[%s5 + $0xbc] sm:$0xf]
  %v140 = vld [vmem:[%s5 + $0xc0] sm:$0xff]
  %v141 = vld [vmem:[%s5 + $0xc8] sm:$0xf]
  %v142 = vld [vmem:[%s5 + $0xcc] sm:$0xff]
  %v143 = vld [vmem:[%s5 + $0xd4] sm:$0xf]
  %v144 = vld [vmem:[%s5 + $0xd8] sm:$0xff]
  %v145 = vld [vmem:[%s5 + $0xe0] sm:$0xf]
  %v146 = vld [vmem:[%s5 + $0xe4] sm:$0xff]
  %v147 = vld [vmem:[%s5 + $0xec] sm:$0xf]
  %v148 = vld [vmem:[%s5 + $0xf0] sm:$0xff]
  %v149 = vld [vmem:[%s5 + $0xf8] sm:$0xf]
  %v150 = vld [vmem:[%s5 + $0xfc] sm:$0xff]
  %v151 = vld [vmem:[%s5 + $0x104] sm:$0xf]
  %v152 = vld [vmem:[%s5 + $0x108] sm:$0xff]
  %v153 = vld [vmem:[%s5 + $0x110] sm:$0xf]
  %v154 = vld [vmem:[%s5 + $0x114] sm:$0xff]
  %v155 = vld [vmem:[%s5 + $0x11c] sm:$0xf]
  %v156 = vld [vmem:[%s5 + $0x120] sm:$0xff]
  %v157 = vld [vmem:[%s5 + $0x128] sm:$0xf]
  %v158 = vld [vmem:[%s5 + $0x12c] sm:$0xff]
  %v159 = vld [vmem:[%s5 + $0x134] sm:$0xf]
  %v160 = vld [vmem:[%s5 + $0x138] sm:$0xff]
  %v161 = vld [vmem:[%s5 + $0x140] sm:$0xf]
  %v162 = vld [vmem:[%s5 + $0x144] sm:$0xff]
  %v163 = vld [vmem:[%s5 + $0x14c] sm:$0xf]
  %v164 = vld [vmem:[%s5 + $0x150] sm:$0xff]
  %v165 = vld [vmem:[%s5 + $0x158] sm:$0xf]
  %v166 = vld [vmem:[%s5 + $0x15c] sm:$0xff]
  %v167 = vld [vmem:[%s5 + $0x164] sm:$0xf]
  %v168 = vld [vmem:[%s5 + $0x168] sm:$0xff]
  %v169 = vld [vmem:[%s5 + $0x170] sm:$0xf]
  %v170 = vld [vmem:[%s5 + $0x174] sm:$0xff]
  %v171 = vld [vmem:[%s5 + $0x17c] sm:$0xf]
  %v172 = vld [vmem:[%s6] sm:$0x7]
  %v173 = vld [vmem:[%s3] ss:$8 sm:$0x3]
  %v175 = vlaneseq
  %v176 = vshrl.u32 %v175, 7
  %v177 = vsub.s32 0, %v176
  %v178 = vrot.slane %v173, %v177
  %v179 = vlaneseq
  %v180 = vshrl.u32 %v179, 7
  %v181 = vsub.s32 1, %v180
  %v182 = vrot.slane %v173, %v181
  %v185 = vadd.f32 %v97, %v178
  %v186 = vadd.f32 %v99, %v182
  %v187 = vadd.f32 %v101, %v178
  %v188 = vadd.f32 %v103, %v182
  %190 = vset.pattern.permute.xlu0 0
  %191 = vperm.xlu0 %190, %v105
  %v192 = vpop.permute.xlu0 %191
  %195 = vset.pattern.permute.xlu0 0
  %196 = vperm.xlu0 %195, %v106
  %v197 = vpop.permute.xlu0 %196
  %v199 = vmul.f32 %v192, %v185
  %v200 = vmul.f32 %v192, %v186
  %v201 = vmul.f32 %v197, %v187
  %v202 = vmul.f32 %v197, %v188
  %v204 = vlaneseq
  %v205 = vshrl.u32 %v204, 7
  %v206 = vsub.s32 0, %v205
  %v207 = vrot.slane %v107, %v206
  %v208 = vlaneseq
  %v209 = vshrl.u32 %v208, 7
  %v210 = vsub.s32 1, %v209
  %v211 = vrot.slane %v107, %v210
  %v214 = vadd.f32 %v199, %v207
  %v215 = vadd.f32 %v200, %v211
  %v216 = vadd.f32 %v201, %v207
  %v217 = vadd.f32 %v202, %v211
  %v218 = vmax.f32 %v214, 0.0
  %v219 = vmax.f32 %v215, 0.0
  %v220 = vmax.f32 %v216, 0.0
  %v221 = vmax.f32 %v217, 0.0
  %v222 = vpack.c.bf16 %v220, %v218
  %v223 = vpack.c.bf16 %v221, %v219
  %v225 = vlaneseq
  %v226 = vshrl.u32 %v225, 7
  %v227 = vsub.s32 0, %v226
  %v228 = vrot.slane %v172, %v227
  %v229 = vlaneseq
  %v230 = vshrl.u32 %v229, 7
  %v231 = vsub.s32 1, %v230
  %v232 = vrot.slane %v172, %v231
  %v233 = vlaneseq
  %v234 = vshrl.u32 %v233, 7
  %v235 = vsub.s32 2, %v234
  %v236 = vrot.slane %v172, %v235
  %v304 = vunpack.c.l.b16 %v108
  %v305 = vunpack.c.h.b16 %v108
  %v306 = vunpack.c.l.b16 %v109
  %v307 = vunpack.c.l.b16 %v110
  %v308 = vunpack.c.h.b16 %v110
  %v309 = vunpack.c.l.b16 %v111
  %v310 = vunpack.c.l.b16 %v112
  %v311 = vunpack.c.h.b16 %v112
  %v312 = vunpack.c.l.b16 %v113
  %v313 = vunpack.c.l.b16 %v114
  %v314 = vunpack.c.h.b16 %v114
  %v315 = vunpack.c.l.b16 %v115
  %v316 = vunpack.c.l.b16 %v116
  %v317 = vunpack.c.h.b16 %v116
  %v318 = vunpack.c.l.b16 %v117
  %v319 = vunpack.c.l.b16 %v118
  %v320 = vunpack.c.h.b16 %v118
  %v321 = vunpack.c.l.b16 %v119
  %v322 = vunpack.c.l.b16 %v120
  %v323 = vunpack.c.h.b16 %v120
  %v324 = vunpack.c.l.b16 %v121
  %v325 = vunpack.c.l.b16 %v122
  %v326 = vunpack.c.h.b16 %v122
  %v327 = vunpack.c.l.b16 %v123
  %v328 = vunpack.c.l.b16 %v124
  %v329 = vunpack.c.h.b16 %v124
  %v330 = vunpack.c.l.b16 %v125
  %v331 = vunpack.c.l.b16 %v126
  %v332 = vunpack.c.h.b16 %v126
  %v333 = vunpack.c.l.b16 %v127
  %v334 = vunpack.c.l.b16 %v128
  %v335 = vunpack.c.h.b16 %v128
  %v336 = vunpack.c.l.b16 %v129
  %v337 = vunpack.c.l.b16 %v130
  %v338 = vunpack.c.h.b16 %v130
  %v339 = vunpack.c.l.b16 %v131
  %v340 = vunpack.c.l.b16 %v132
  %v341 = vunpack.c.h.b16 %v132
  %v342 = vunpack.c.l.b16 %v133
  %v343 = vunpack.c.l.b16 %v134
  %v344 = vunpack.c.h.b16 %v134
  %v345 = vunpack.c.l.b16 %v135
  %v346 = vunpack.c.l.b16 %v136
  %v347 = vunpack.c.h.b16 %v136
  %v348 = vunpack.c.l.b16 %v137
  %v349 = vunpack.c.l.b16 %v138
  %v350 = vunpack.c.h.b16 %v138
  %v351 = vunpack.c.l.b16 %v139
  %v352 = vunpack.c.l.b16 %v140
  %v353 = vunpack.c.h.b16 %v140
  %v354 = vunpack.c.l.b16 %v141
  %v355 = vunpack.c.l.b16 %v142
  %v356 = vunpack.c.h.b16 %v142
  %v357 = vunpack.c.l.b16 %v143
  %v358 = vunpack.c.l.b16 %v144
  %v359 = vunpack.c.h.b16 %v144
  %v360 = vunpack.c.l.b16 %v145
  %v361 = vunpack.c.l.b16 %v146
  %v362 = vunpack.c.h.b16 %v146
  %v363 = vunpack.c.l.b16 %v147
  %v364 = vunpack.c.l.b16 %v148
  %v365 = vunpack.c.h.b16 %v148
  %v366 = vunpack.c.l.b16 %v149
  %v367 = vunpack.c.l.b16 %v150
  %v368 = vunpack.c.h.b16 %v150
  %v369 = vunpack.c.l.b16 %v151
  %v370 = vunpack.c.l.b16 %v152
  %v371 = vunpack.c.h.b16 %v152
  %v372 = vunpack.c.l.b16 %v153
  %v373 = vunpack.c.l.b16 %v154
  %v374 = vunpack.c.h.b16 %v154
  %v375 = vunpack.c.l.b16 %v155
  %v376 = vunpack.c.l.b16 %v156
  %v377 = vunpack.c.h.b16 %v156
  %v378 = vunpack.c.l.b16 %v157
  %v379 = vunpack.c.l.b16 %v158
  %v380 = vunpack.c.h.b16 %v158
  %v381 = vunpack.c.l.b16 %v159
  %v382 = vunpack.c.l.b16 %v160
  %v383 = vunpack.c.h.b16 %v160
  %v384 = vunpack.c.l.b16 %v161
  %v385 = vunpack.c.l.b16 %v162
  %v386 = vunpack.c.h.b16 %v162
  %v387 = vunpack.c.l.b16 %v163
  %v388 = vunpack.c.l.b16 %v164
  %v389 = vunpack.c.h.b16 %v164
  %v390 = vunpack.c.l.b16 %v165
  %v391 = vunpack.c.l.b16 %v166
  %v392 = vunpack.c.h.b16 %v166
  %v393 = vunpack.c.l.b16 %v167
  %v394 = vunpack.c.l.b16 %v168
  %v395 = vunpack.c.h.b16 %v168
  %v396 = vunpack.c.l.b16 %v169
  %v397 = vunpack.c.l.b16 %v170
  %v398 = vunpack.c.h.b16 %v170
  %v399 = vunpack.c.l.b16 %v171
  %v400 = vpack.c.b16 %v307, %v304
  %v401 = vpack.c.b16 %v308, %v305
  %v402 = vpack.c.b16 %v309, %v306
  %v403 = vpack.c.b16 %v313, %v310
  %v404 = vpack.c.b16 %v314, %v311
  %v405 = vpack.c.b16 %v315, %v312
  %v406 = vpack.c.b16 %v319, %v316
  %v407 = vpack.c.b16 %v320, %v317
  %v408 = vpack.c.b16 %v321, %v318
  %v409 = vpack.c.b16 %v325, %v322
  %v410 = vpack.c.b16 %v326, %v323
  %v411 = vpack.c.b16 %v327, %v324
  %v412 = vpack.c.b16 %v331, %v328
  %v413 = vpack.c.b16 %v332, %v329
  %v414 = vpack.c.b16 %v333, %v330
  %v415 = vpack.c.b16 %v337, %v334
  %v416 = vpack.c.b16 %v338, %v335
  %v417 = vpack.c.b16 %v339, %v336
  %v418 = vpack.c.b16 %v343, %v340
  %v419 = vpack.c.b16 %v344, %v341
  %v420 = vpack.c.b16 %v345, %v342
  %v421 = vpack.c.b16 %v349, %v346
  %v422 = vpack.c.b16 %v350, %v347
  %v423 = vpack.c.b16 %v351, %v348
  %v424 = vpack.c.b16 %v355, %v352
  %v425 = vpack.c.b16 %v356, %v353
  %v426 = vpack.c.b16 %v357, %v354
  %v427 = vpack.c.b16 %v361, %v358
  %v428 = vpack.c.b16 %v362, %v359
  %v429 = vpack.c.b16 %v363, %v360
  %v430 = vpack.c.b16 %v367, %v364
  %v431 = vpack.c.b16 %v368, %v365
  %v432 = vpack.c.b16 %v369, %v366
  %v433 = vpack.c.b16 %v373, %v370
  %v434 = vpack.c.b16 %v374, %v371
  %v435 = vpack.c.b16 %v375, %v372
  %v436 = vpack.c.b16 %v379, %v376
  %v437 = vpack.c.b16 %v380, %v377
  %v438 = vpack.c.b16 %v381, %v378
  %v439 = vpack.c.b16 %v385, %v382
  %v440 = vpack.c.b16 %v386, %v383
  %v441 = vpack.c.b16 %v387, %v384
  %v442 = vpack.c.b16 %v391, %v388
  %v443 = vpack.c.b16 %v392, %v389
  %v444 = vpack.c.b16 %v393, %v390
  %v445 = vpack.c.b16 %v397, %v394
  %v446 = vpack.c.b16 %v398, %v395
  %v447 = vpack.c.b16 %v399, %v396
  %496 = vmatprep.subr.bf16.mxu0 %v401
  %497 = vmatpush1.bf16.msra.mxu0 %v400
  %498 = vmatprep.subr.bf16.mxu0 %v404
  %499 = vmatpush1.bf16.msra.mxu0 %v403
  %500 = vmatprep.subr.bf16.mxu0 %v407
  %501 = vmatpush1.bf16.msra.mxu0 %v406
  %502 = vmatprep.subr.bf16.mxu0 %v410
  %503 = vmatpush1.bf16.msra.mxu0 %v409
  %504 = vmatprep.subr.bf16.mxu0 %v413
  %505 = vmatpush1.bf16.msra.mxu0 %v412
  %506 = vmatprep.subr.bf16.mxu0 %v416
  %507 = vmatpush1.bf16.msra.mxu0 %v415
  %508 = vmatprep.subr.bf16.mxu0 %v419
  %509 = vmatpush1.bf16.msra.mxu0 %v418
  %510 = vmatprep.subr.bf16.mxu0 %v422
  %511 = vmatpush1.bf16.msra.mxu0 %v421
  %512 = vmatprep.subr.bf16.mxu0 %v425
  %513 = vmatpush1.bf16.msra.mxu0 %v424
  %514 = vmatprep.subr.bf16.mxu0 %v428
  %515 = vmatpush1.bf16.msra.mxu0 %v427
  %516 = vmatprep.subr.bf16.mxu0 %v431
  %517 = vmatpush1.bf16.msra.mxu0 %v430
  %518 = vmatprep.subr.bf16.mxu0 %v434
  %519 = vmatpush1.bf16.msra.mxu0 %v433
  %520 = vmatprep.subr.bf16.mxu0 %v437
  %521 = vmatpush1.bf16.msra.mxu0 %v436
  %522 = vmatprep.subr.bf16.mxu0 %v440
  %523 = vmatpush1.bf16.msra.mxu0 %v439
  %524 = vmatprep.subr.bf16.mxu0 %v443
  %525 = vmatpush1.bf16.msra.mxu0 %v442
  %526 = vmatprep.subr.bf16.mxu0 %v446
  %527 = vmatpush1.bf16.msra.mxu0 %v445
  %528 = vmatprep.mubr.bf16.mxu0 %v223
  %529 = vmatmul.mubr.bf16.gmra.mrb[0].mxu0 %v222
  %v530 = vpop.f32.mrb[0].mxu0
  %v531 = vadd.f32 %v228, %v530
  %v532 = vpop.f32.mrb[0].mxu0
  %v533 = vadd.f32 %v232, %v532
  %v534 = vpop.f32.mrb[0].mxu0
  %v535 = vadd.f32 %v228, %v534
  %v536 = vpop.f32.mrb[0].mxu0
  %v537 = vadd.f32 %v232, %v536
  %538 = vdwg.mxu0
  %539 = vmatprep.subr.bf16.mxu0 0
  %540 = vmatpush1.bf16.msra.mxu0 %v402
  %541 = vmatprep.subr.bf16.mxu0 0
  %542 = vmatpush1.bf16.msra.mxu0 %v405
  %543 = vmatprep.subr.bf16.mxu0 0
  %544 = vmatpush1.bf16.msra.mxu0 %v408
  %545 = vmatprep.subr.bf16.mxu0 0
  %546 = vmatpush1.bf16.msra.mxu0 %v411
  %547 = vmatprep.subr.bf16.mxu0 0
  %548 = vmatpush1.bf16.msra.mxu0 %v414
  %549 = vmatprep.subr.bf16.mxu0 0
  %550 = vmatpush1.bf16.msra.mxu0 %v417
  %551 = vmatprep.subr.bf16.mxu0 0
  %552 = vmatpush1.bf16.msra.mxu0 %v420
  %553 = vmatprep.subr.bf16.mxu0 0
  %554 = vmatpush1.bf16.msra.mxu0 %v423
  %555 = vmatprep.subr.bf16.mxu0 0
  %556 = vmatpush1.bf16.msra.mxu0 %v426
  %557 = vmatprep.subr.bf16.mxu0 0
  %558 = vmatpush1.bf16.msra.mxu0 %v429
  %559 = vmatprep.subr.bf16.mxu0 0
  %560 = vmatpush1.bf16.msra.mxu0 %v432
  %561 = vmatprep.subr.bf16.mxu0 0
  %562 = vmatpush1.bf16.msra.mxu0 %v435
  %563 = vmatprep.subr.bf16.mxu0 0
  %564 = vmatpush1.bf16.msra.mxu0 %v438
  %565 = vmatprep.subr.bf16.mxu0 0
  %566 = vmatpush1.bf16.msra.mxu0 %v441
  %567 = vmatprep.subr.bf16.mxu0 0
  %568 = vmatpush1.bf16.msra.mxu0 %v444
  %569 = vmatprep.subr.bf16.mxu0 0
  %570 = vmatpush1.bf16.msra.mxu0 %v447
  %571 = vmatprep.mubr.bf16.mxu0 %v223
  %572 = vmatmul.mubr.bf16.gmra.mrb[0].mxu0 %v222
  %v573 = vpop.f32.mrb[0].mxu0
  %v574 = vadd.f32 %v236, %v573
  %v575 = vpop.f32.mrb[0].mxu0
  %v576 = vpop.f32.mrb[0].mxu0
  %v577 = vadd.f32 %v236, %v576
  %v578 = vpop.f32.mrb[0].mxu0
  %579 = vdwg.mxu0
  %v580 = vmax.f32 %v531, 0.0
  %v581 = vmax.f32 %v533, 0.0
  %v582 = vmax.f32 %v574, 0.0
  %v583 = vmax.f32 %v535, 0.0
  %v584 = vmax.f32 %v537, 0.0
  %v585 = vmax.f32 %v577, 0.0
  %v592 = vcombine.low %v580, %v581
  %v593 = vcombine.high %v580, %v581
  %v594 = vcombine.high %v582, %v582
  %v596 = vunpack.c.l.s4 1966171168
  %v597 = vunpack.c.0.s8 %v596
  %v598 = vlaneseq
  %v599 = vshrl.u32 %v598, 7
  %v600 = vsub.s32 %v597, %v599
  %v601 = vrot.slane %v592, %v600
  %v603 = vunpack.c.l.s4 1966171168
  %v604 = vunpack.c.0.s8 %v603
  %v605 = vlaneseq
  %v606 = vshrl.u32 %v605, 7
  %v607 = vsub.s32 %v604, %v606
  %v608 = vrot.slane %v593, %v607
  %v610 = vunpack.c.l.s4 1966171168
  %v611 = vunpack.c.0.s8 %v610
  %v612 = vlaneseq
  %v613 = vshrl.u32 %v612, 7
  %v614 = vsub.s32 %v611, %v613
  %v615 = vrot.slane %v582, %v614
  %v617 = vunpack.c.l.s4 1966171168
  %v618 = vunpack.c.0.s8 %v617
  %v619 = vlaneseq
  %v620 = vshrl.u32 %v619, 7
  %v621 = vsub.s32 %v618, %v620
  %v622 = vrot.slane %v594, %v621
  %v623 = vcombine.low %v601, %v615
  %v624 = vcombine.high %v601, %v615
  %v625 = vcombine.low %v608, %v622
  %v626 = vcombine.high %v608, %v622
  %v628 = vunpack.c.l.s4 1966171168
  %v629 = vunpack.c.0.s8 %v628
  %v630 = vlaneseq
  %v631 = vshrl.u32 %v630, 7
  %v632 = vsub.s32 %v629, %v631
  %v633 = vrot.slane %v623, %v632
  %v635 = vunpack.c.l.s4 1966171168
  %v636 = vunpack.c.0.s8 %v635
  %v637 = vlaneseq
  %v638 = vshrl.u32 %v637, 7
  %v639 = vsub.s32 %v636, %v638
  %v640 = vrot.slane %v625, %v639
  %v642 = vunpack.c.l.s4 1966171168
  %v643 = vunpack.c.0.s8 %v642
  %v644 = vlaneseq
  %v645 = vshrl.u32 %v644, 7
  %v646 = vsub.s32 %v643, %v645
  %v647 = vrot.slane %v624, %v646
  %v649 = vunpack.c.l.s4 1966171168
  %v650 = vunpack.c.0.s8 %v649
  %v651 = vlaneseq
  %v652 = vshrl.u32 %v651, 7
  %v653 = vsub.s32 %v650, %v652
  %v654 = vrot.slane %v626, %v653
  %v655 = vcombine.high %v633, %v633
  %v656 = vcombine.high %v640, %v640
  %v657 = vcombine.high %v647, %v647
  %v658 = vcombine.high %v654, %v654
  %v659 = vcombine.low %v583, %v584
  %v660 = vcombine.high %v583, %v584
  %v661 = vcombine.high %v585, %v585
  %v663 = vunpack.c.l.s4 1966171168
  %v664 = vunpack.c.0.s8 %v663
  %v665 = vlaneseq
  %v666 = vshrl.u32 %v665, 7
  %v667 = vsub.s32 %v664, %v666
  %v668 = vrot.slane %v659, %v667
  %v670 = vunpack.c.l.s4 1966171168
  %v671 = vunpack.c.0.s8 %v670
  %v672 = vlaneseq
  %v673 = vshrl.u32 %v672, 7
  %v674 = vsub.s32 %v671, %v673
  %v675 = vrot.slane %v660, %v674
  %v677 = vunpack.c.l.s4 1966171168
  %v678 = vunpack.c.0.s8 %v677
  %v679 = vlaneseq
  %v680 = vshrl.u32 %v679, 7
  %v681 = vsub.s32 %v678, %v680
  %v682 = vrot.slane %v585, %v681
  %v684 = vunpack.c.l.s4 1966171168
  %v685 = vunpack.c.0.s8 %v684
  %v686 = vlaneseq
  %v687 = vshrl.u32 %v686, 7
  %v688 = vsub.s32 %v685, %v687
  %v689 = vrot.slane %v661, %v688
  %v690 = vcombine.low %v668, %v682
  %v691 = vcombine.high %v668, %v682
  %v692 = vcombine.low %v675, %v689
  %v693 = vcombine.high %v675, %v689
  %v695 = vunpack.c.l.s4 1966171168
  %v696 = vunpack.c.0.s8 %v695
  %v697 = vlaneseq
  %v698 = vshrl.u32 %v697, 7
  %v699 = vsub.s32 %v696, %v698
  %v700 = vrot.slane %v690, %v699
  %v702 = vunpack.c.l.s4 1966171168
  %v703 = vunpack.c.0.s8 %v702
  %v704 = vlaneseq
  %v705 = vshrl.u32 %v704, 7
  %v706 = vsub.s32 %v703, %v705
  %v707 = vrot.slane %v692, %v706
  %v709 = vunpack.c.l.s4 1966171168
  %v710 = vunpack.c.0.s8 %v709
  %v711 = vlaneseq
  %v712 = vshrl.u32 %v711, 7
  %v713 = vsub.s32 %v710, %v712
  %v714 = vrot.slane %v691, %v713
  %v716 = vunpack.c.l.s4 1966171168
  %v717 = vunpack.c.0.s8 %v716
  %v718 = vlaneseq
  %v719 = vshrl.u32 %v718, 7
  %v720 = vsub.s32 %v717, %v719
  %v721 = vrot.slane %v693, %v720
  %v722 = vcombine.high %v700, %v700
  %v723 = vcombine.high %v707, %v707
  %v724 = vcombine.high %v714, %v714
  %v725 = vcombine.high %v721, %v721
  %v742 = vlaneseq
  %vm743 = vcmp.ge.s32.totalorder %v742, 0
  %vm744 = vcmp.lt.s32.totalorder %v742, 384
  %vm745 = vmand %vm743, %vm744
  %746 = vst.msk [vmem:[%s7] ss:$8 sm:$0x7] %vm745, %v633
  %747 = vst.msk [vmem:[%s7] ss:$8 sm:$0x0] %vm745, %v633
  %s748 = scalar_lea.vmem %s7, 24
  %749 = vst.msk [vmem:[%s748] ss:$8 sm:$0x7] %vm745, %v647
  %750 = vst.msk [vmem:[%s748] ss:$8 sm:$0x0] %vm745, %v647
  %s751 = scalar_lea.vmem %s7, 48
  %752 = vst.msk [vmem:[%s751] ss:$8 sm:$0x7] %vm745, %v655
  %753 = vst.msk [vmem:[%s751] ss:$8 sm:$0x0] %vm745, %v655
  %s754 = scalar_lea.vmem %s7, 72
  %755 = vst.msk [vmem:[%s754] ss:$8 sm:$0x7] %vm745, %v657
  %756 = vst.msk [vmem:[%s754] ss:$8 sm:$0x0] %vm745, %v657
  %s757 = scalar_lea.vmem %s7, 96
  %758 = vst.msk [vmem:[%s757] ss:$8 sm:$0x7] %vm745, %v640
  %759 = vst.msk [vmem:[%s757] ss:$8 sm:$0x0] %vm745, %v640
  %s760 = scalar_lea.vmem %s7, 120
  %761 = vst.msk [vmem:[%s760] ss:$8 sm:$0x7] %vm745, %v654
  %762 = vst.msk [vmem:[%s760] ss:$8 sm:$0x0] %vm745, %v654
  %s763 = scalar_lea.vmem %s7, 144
  %764 = vst.msk [vmem:[%s763] ss:$8 sm:$0x7] %vm745, %v656
  %765 = vst.msk [vmem:[%s763] ss:$8 sm:$0x0] %vm745, %v656
  %s766 = scalar_lea.vmem %s7, 168
  %767 = vst.msk [vmem:[%s766] ss:$8 sm:$0x7] %vm745, %v658
  %768 = vst.msk [vmem:[%s766] ss:$8 sm:$0x0] %vm745, %v658
  %s769 = scalar_lea.vmem %s7, 192
  %770 = vst.msk [vmem:[%s769] ss:$8 sm:$0x7] %vm745, %v700
  %771 = vst.msk [vmem:[%s769] ss:$8 sm:$0x0] %vm745, %v700
  %s772 = scalar_lea.vmem %s7, 216
  %773 = vst.msk [vmem:[%s772] ss:$8 sm:$0x7] %vm745, %v714
  %774 = vst.msk [vmem:[%s772] ss:$8 sm:$0x0] %vm745, %v714
  %s775 = scalar_lea.vmem %s7, 240
  %776 = vst.msk [vmem:[%s775] ss:$8 sm:$0x7] %vm745, %v722
  %777 = vst.msk [vmem:[%s775] ss:$8 sm:$0x0] %vm745, %v722
  %s778 = scalar_lea.vmem %s7, 264
  %779 = vst.msk [vmem:[%s778] ss:$8 sm:$0x7] %vm745, %v724
  %780 = vst.msk [vmem:[%s778] ss:$8 sm:$0x0] %vm745, %v724
  %s781 = scalar_lea.vmem %s7, 288
  %782 = vst.msk [vmem:[%s781] ss:$8 sm:$0x7] %vm745, %v707
  %783 = vst.msk [vmem:[%s781] ss:$8 sm:$0x0] %vm745, %v707
  %s784 = scalar_lea.vmem %s7, 312
  %785 = vst.msk [vmem:[%s784] ss:$8 sm:$0x7] %vm745, %v721
  %786 = vst.msk [vmem:[%s784] ss:$8 sm:$0x0] %vm745, %v721
  %s787 = scalar_lea.vmem %s7, 336
  %788 = vst.msk [vmem:[%s787] ss:$8 sm:$0x7] %vm745, %v723
  %789 = vst.msk [vmem:[%s787] ss:$8 sm:$0x0] %vm745, %v723
  %s790 = scalar_lea.vmem %s7, 360
  %791 = vst.msk [vmem:[%s790] ss:$8 sm:$0x7] %vm745, %v725
  %792 = vst.msk [vmem:[%s790] ss:$8 sm:$0x0] %vm745, %v725
  %s793 = scalar_lea.vmem %s3, 1
  %v794 = vld [vmem:[%s793] ss:$8 sm:$0x3]
  %v796 = vlaneseq
  %v797 = vshrl.u32 %v796, 7
  %v798 = vsub.s32 0, %v797
  %v799 = vrot.slane %v794, %v798
  %v800 = vlaneseq
  %v801 = vshrl.u32 %v800, 7
  %v802 = vsub.s32 1, %v801
  %v803 = vrot.slane %v794, %v802
  %v806 = vadd.f32 %v97, %v799
  %v807 = vadd.f32 %v99, %v803
  %v808 = vadd.f32 %v101, %v799
  %v809 = vadd.f32 %v103, %v803
  %v810 = vmul.f32 %v192, %v806
  %v811 = vmul.f32 %v192, %v807
  %v812 = vmul.f32 %v197, %v808
  %v813 = vmul.f32 %v197, %v809
  %v814 = vadd.f32 %v810, %v207
  %v815 = vadd.f32 %v811, %v211
  %v816 = vadd.f32 %v812, %v207
  %v817 = vadd.f32 %v813, %v211
  %v818 = vmax.f32 %v814, 0.0
  %v819 = vmax.f32 %v815, 0.0
  %v820 = vmax.f32 %v816, 0.0
  %v821 = vmax.f32 %v817, 0.0
  %v822 = vpack.c.bf16 %v820, %v818
  %v823 = vpack.c.bf16 %v821, %v819
  %824 = vmatprep.subr.bf16.mxu0 %v401
  %825 = vmatpush1.bf16.msra.mxu0 %v400
  %826 = vmatprep.subr.bf16.mxu0 %v404
  %827 = vmatpush1.bf16.msra.mxu0 %v403
  %828 = vmatprep.subr.bf16.mxu0 %v407
  %829 = vmatpush1.bf16.msra.mxu0 %v406
  %830 = vmatprep.subr.bf16.mxu0 %v410
  %831 = vmatpush1.bf16.msra.mxu0 %v409
  %832 = vmatprep.subr.bf16.mxu0 %v413
  %833 = vmatpush1.bf16.msra.mxu0 %v412
  %834 = vmatprep.subr.bf16.mxu0 %v416
  %835 = vmatpush1.bf16.msra.mxu0 %v415
  %836 = vmatprep.subr.bf16.mxu0 %v419
  %837 = vmatpush1.bf16.msra.mxu0 %v418
  %838 = vmatprep.subr.bf16.mxu0 %v422
  %839 = vmatpush1.bf16.msra.mxu0 %v421
  %840 = vmatprep.subr.bf16.mxu0 %v425
  %841 = vmatpush1.bf16.msra.mxu0 %v424
  %842 = vmatprep.subr.bf16.mxu0 %v428
  %843 = vmatpush1.bf16.msra.mxu0 %v427
  %844 = vmatprep.subr.bf16.mxu0 %v431
  %845 = vmatpush1.bf16.msra.mxu0 %v430
  %846 = vmatprep.subr.bf16.mxu0 %v434
  %847 = vmatpush1.bf16.msra.mxu0 %v433
  %848 = vmatprep.subr.bf16.mxu0 %v437
  %849 = vmatpush1.bf16.msra.mxu0 %v436
  %850 = vmatprep.subr.bf16.mxu0 %v440
  %851 = vmatpush1.bf16.msra.mxu0 %v439
  %852 = vmatprep.subr.bf16.mxu0 %v443
  %853 = vmatpush1.bf16.msra.mxu0 %v442
  %854 = vmatprep.subr.bf16.mxu0 %v446
  %855 = vmatpush1.bf16.msra.mxu0 %v445
  %856 = vmatprep.mubr.bf16.mxu0 %v823
  %857 = vmatmul.mubr.bf16.gmra.mrb[0].mxu0 %v822
  %v858 = vpop.f32.mrb[0].mxu0
  %v859 = vadd.f32 %v228, %v858
  %v860 = vpop.f32.mrb[0].mxu0
  %v861 = vadd.f32 %v232, %v860
  %v862 = vpop.f32.mrb[0].mxu0
  %v863 = vadd.f32 %v228, %v862
  %v864 = vpop.f32.mrb[0].mxu0
  %v865 = vadd.f32 %v232, %v864
  %866 = vdwg.mxu0
  %867 = vmatprep.subr.bf16.mxu0 0
  %868 = vmatpush1.bf16.msra.mxu0 %v402
  %869 = vmatprep.subr.bf16.mxu0 0
  %870 = vmatpush1.bf16.msra.mxu0 %v405
  %871 = vmatprep.subr.bf16.mxu0 0
  %872 = vmatpush1.bf16.msra.mxu0 %v408
  %873 = vmatprep.subr.bf16.mxu0 0
  %874 = vmatpush1.bf16.msra.mxu0 %v411
  %875 = vmatprep.subr.bf16.mxu0 0
  %876 = vmatpush1.bf16.msra.mxu0 %v414
  %877 = vmatprep.subr.bf16.mxu0 0
  %878 = vmatpush1.bf16.msra.mxu0 %v417
  %879 = vmatprep.subr.bf16.mxu0 0
  %880 = vmatpush1.bf16.msra.mxu0 %v420
  %881 = vmatprep.subr.bf16.mxu0 0
  %882 = vmatpush1.bf16.msra.mxu0 %v423
  %883 = vmatprep.subr.bf16.mxu0 0
  %884 = vmatpush1.bf16.msra.mxu0 %v426
  %885 = vmatprep.subr.bf16.mxu0 0
  %886 = vmatpush1.bf16.msra.mxu0 %v429
  %887 = vmatprep.subr.bf16.mxu0 0
  %888 = vmatpush1.bf16.msra.mxu0 %v432
  %889 = vmatprep.subr.bf16.mxu0 0
  %890 = vmatpush1.bf16.msra.mxu0 %v435
  %891 = vmatprep.subr.bf16.mxu0 0
  %892 = vmatpush1.bf16.msra.mxu0 %v438
  %893 = vmatprep.subr.bf16.mxu0 0
  %894 = vmatpush1.bf16.msra.mxu0 %v441
  %895 = vmatprep.subr.bf16.mxu0 0
  %896 = vmatpush1.bf16.msra.mxu0 %v444
  %897 = vmatprep.subr.bf16.mxu0 0
  %898 = vmatpush1.bf16.msra.mxu0 %v447
  %899 = vmatprep.mubr.bf16.mxu0 %v823
  %900 = vmatmul.mubr.bf16.gmra.mrb[0].mxu0 %v822
  %v901 = vpop.f32.mrb[0].mxu0
  %v902 = vadd.f32 %v236, %v901
  %v903 = vpop.f32.mrb[0].mxu0
  %v904 = vpop.f32.mrb[0].mxu0
  %v905 = vadd.f32 %v236, %v904
  %v906 = vpop.f32.mrb[0].mxu0
  %907 = vdwg.mxu0
  %v908 = vmax.f32 %v859, 0.0
  %v909 = vmax.f32 %v861, 0.0
  %v910 = vmax.f32 %v902, 0.0
  %v911 = vmax.f32 %v863, 0.0
  %v912 = vmax.f32 %v865, 0.0
  %v913 = vmax.f32 %v905, 0.0
  %v920 = vcombine.low %v908, %v909
  %v921 = vcombine.high %v908, %v909
  %v922 = vcombine.high %v910, %v910
  %v924 = vunpack.c.l.s4 1966171168
  %v925 = vunpack.c.0.s8 %v924
  %v926 = vlaneseq
  %v927 = vshrl.u32 %v926, 7
  %v928 = vsub.s32 %v925, %v927
  %v929 = vrot.slane %v920, %v928
  %v931 = vunpack.c.l.s4 1966171168
  %v932 = vunpack.c.0.s8 %v931
  %v933 = vlaneseq
  %v934 = vshrl.u32 %v933, 7
  %v935 = vsub.s32 %v932, %v934
  %v936 = vrot.slane %v921, %v935
  %v938 = vunpack.c.l.s4 1966171168
  %v939 = vunpack.c.0.s8 %v938
  %v940 = vlaneseq
  %v941 = vshrl.u32 %v940, 7
  %v942 = vsub.s32 %v939, %v941
  %v943 = vrot.slane %v910, %v942
  %v945 = vunpack.c.l.s4 1966171168
  %v946 = vunpack.c.0.s8 %v945
  %v947 = vlaneseq
  %v948 = vshrl.u32 %v947, 7
  %v949 = vsub.s32 %v946, %v948
  %v950 = vrot.slane %v922, %v949
  %v951 = vcombine.low %v929, %v943
  %v952 = vcombine.high %v929, %v943
  %v953 = vcombine.low %v936, %v950
  %v954 = vcombine.high %v936, %v950
  %v956 = vunpack.c.l.s4 1966171168
  %v957 = vunpack.c.0.s8 %v956
  %v958 = vlaneseq
  %v959 = vshrl.u32 %v958, 7
  %v960 = vsub.s32 %v957, %v959
  %v961 = vrot.slane %v951, %v960
  %v963 = vunpack.c.l.s4 1966171168
  %v964 = vunpack.c.0.s8 %v963
  %v965 = vlaneseq
  %v966 = vshrl.u32 %v965, 7
  %v967 = vsub.s32 %v964, %v966
  %v968 = vrot.slane %v953, %v967
  %v970 = vunpack.c.l.s4 1966171168
  %v971 = vunpack.c.0.s8 %v970
  %v972 = vlaneseq
  %v973 = vshrl.u32 %v972, 7
  %v974 = vsub.s32 %v971, %v973
  %v975 = vrot.slane %v952, %v974
  %v977 = vunpack.c.l.s4 1966171168
  %v978 = vunpack.c.0.s8 %v977
  %v979 = vlaneseq
  %v980 = vshrl.u32 %v979, 7
  %v981 = vsub.s32 %v978, %v980
  %v982 = vrot.slane %v954, %v981
  %v983 = vcombine.high %v961, %v961
  %v984 = vcombine.high %v968, %v968
  %v985 = vcombine.high %v975, %v975
  %v986 = vcombine.high %v982, %v982
  %v987 = vcombine.low %v911, %v912
  %v988 = vcombine.high %v911, %v912
  %v989 = vcombine.high %v913, %v913
  %v991 = vunpack.c.l.s4 1966171168
  %v992 = vunpack.c.0.s8 %v991
  %v993 = vlaneseq
  %v994 = vshrl.u32 %v993, 7
  %v995 = vsub.s32 %v992, %v994
  %v996 = vrot.slane %v987, %v995
  %v998 = vunpack.c.l.s4 1966171168
  %v999 = vunpack.c.0.s8 %v998
  %v1000 = vlaneseq
  %v1001 = vshrl.u32 %v1000, 7
  %v1002 = vsub.s32 %v999, %v1001
  %v1003 = vrot.slane %v988, %v1002
  %v1005 = vunpack.c.l.s4 1966171168
  %v1006 = vunpack.c.0.s8 %v1005
  %v1007 = vlaneseq
  %v1008 = vshrl.u32 %v1007, 7
  %v1009 = vsub.s32 %v1006, %v1008
  %v1010 = vrot.slane %v913, %v1009
  %v1012 = vunpack.c.l.s4 1966171168
  %v1013 = vunpack.c.0.s8 %v1012
  %v1014 = vlaneseq
  %v1015 = vshrl.u32 %v1014, 7
  %v1016 = vsub.s32 %v1013, %v1015
  %v1017 = vrot.slane %v989, %v1016
  %v1018 = vcombine.low %v996, %v1010
  %v1019 = vcombine.high %v996, %v1010
  %v1020 = vcombine.low %v1003, %v1017
  %v1021 = vcombine.high %v1003, %v1017
  %v1023 = vunpack.c.l.s4 1966171168
  %v1024 = vunpack.c.0.s8 %v1023
  %v1025 = vlaneseq
  %v1026 = vshrl.u32 %v1025, 7
  %v1027 = vsub.s32 %v1024, %v1026
  %v1028 = vrot.slane %v1018, %v1027
  %v1030 = vunpack.c.l.s4 1966171168
  %v1031 = vunpack.c.0.s8 %v1030
  %v1032 = vlaneseq
  %v1033 = vshrl.u32 %v1032, 7
  %v1034 = vsub.s32 %v1031, %v1033
  %v1035 = vrot.slane %v1020, %v1034
  %v1037 = vunpack.c.l.s4 1966171168
  %v1038 = vunpack.c.0.s8 %v1037
  %v1039 = vlaneseq
  %v1040 = vshrl.u32 %v1039, 7
  %v1041 = vsub.s32 %v1038, %v1040
  %v1042 = vrot.slane %v1019, %v1041
  %v1044 = vunpack.c.l.s4 1966171168
  %v1045 = vunpack.c.0.s8 %v1044
  %v1046 = vlaneseq
  %v1047 = vshrl.u32 %v1046, 7
  %v1048 = vsub.s32 %v1045, %v1047
  %v1049 = vrot.slane %v1021, %v1048
  %v1050 = vcombine.high %v1028, %v1028
  %v1051 = vcombine.high %v1035, %v1035
  %v1052 = vcombine.high %v1042, %v1042
  %v1053 = vcombine.high %v1049, %v1049
  %s1070 = scalar_lea.vmem %s7, 1
  %1071 = vst.msk [vmem:[%s1070] ss:$8 sm:$0x7] %vm745, %v961
  %1072 = vst.msk [vmem:[%s1070] ss:$8 sm:$0x0] %vm745, %v961
  %s1073 = scalar_lea.vmem %s7, 25
  %1074 = vst.msk [vmem:[%s1073] ss:$8 sm:$0x7] %vm745, %v975
  %1075 = vst.msk [vmem:[%s1073] ss:$8 sm:$0x0] %vm745, %v975
  %s1076 = scalar_lea.vmem %s7, 49
  %1077 = vst.msk [vmem:[%s1076] ss:$8 sm:$0x7] %vm745, %v983
  %1078 = vst.msk [vmem:[%s1076] ss:$8 sm:$0x0] %vm745, %v983
  %s1079 = scalar_lea.vmem %s7, 73
  %1080 = vst.msk [vmem:[%s1079] ss:$8 sm:$0x7] %vm745, %v985
  %1081 = vst.msk [vmem:[%s1079] ss:$8 sm:$0x0] %vm745, %v985
  %s1082 = scalar_lea.vmem %s7, 97
  %1083 = vst.msk [vmem:[%s1082] ss:$8 sm:$0x7] %vm745, %v968
  %1084 = vst.msk [vmem:[%s1082] ss:$8 sm:$0x0] %vm745, %v968
  %s1085 = scalar_lea.vmem %s7, 121
  %1086 = vst.msk [vmem:[%s1085] ss:$8 sm:$0x7] %vm745, %v982
  %1087 = vst.msk [vmem:[%s1085] ss:$8 sm:$0x0] %vm745, %v982
  %s1088 = scalar_lea.vmem %s7, 145
  %1089 = vst.msk [vmem:[%s1088] ss:$8 sm:$0x7] %vm745, %v984
  %1090 = vst.msk [vmem:[%s1088] ss:$8 sm:$0x0] %vm745, %v984
  %s1091 = scalar_lea.vmem %s7, 169
  %1092 = vst.msk [vmem:[%s1091] ss:$8 sm:$0x7] %vm745, %v986
  %1093 = vst.msk [vmem:[%s1091] ss:$8 sm:$0x0] %vm745, %v986
  %s1094 = scalar_lea.vmem %s7, 193
  %1095 = vst.msk [vmem:[%s1094] ss:$8 sm:$0x7] %vm745, %v1028
  %1096 = vst.msk [vmem:[%s1094] ss:$8 sm:$0x0] %vm745, %v1028
  %s1097 = scalar_lea.vmem %s7, 217
  %1098 = vst.msk [vmem:[%s1097] ss:$8 sm:$0x7] %vm745, %v1042
  %1099 = vst.msk [vmem:[%s1097] ss:$8 sm:$0x0] %vm745, %v1042
  %s1100 = scalar_lea.vmem %s7, 241
  %1101 = vst.msk [vmem:[%s1100] ss:$8 sm:$0x7] %vm745, %v1050
  %1102 = vst.msk [vmem:[%s1100] ss:$8 sm:$0x0] %vm745, %v1050
  %s1103 = scalar_lea.vmem %s7, 265
  %1104 = vst.msk [vmem:[%s1103] ss:$8 sm:$0x7] %vm745, %v1052
  %1105 = vst.msk [vmem:[%s1103] ss:$8 sm:$0x0] %vm745, %v1052
  %s1106 = scalar_lea.vmem %s7, 289
  %1107 = vst.msk [vmem:[%s1106] ss:$8 sm:$0x7] %vm745, %v1035
  %1108 = vst.msk [vmem:[%s1106] ss:$8 sm:$0x0] %vm745, %v1035
  %s1109 = scalar_lea.vmem %s7, 313
  %1110 = vst.msk [vmem:[%s1109] ss:$8 sm:$0x7] %vm745, %v1049
  %1111 = vst.msk [vmem:[%s1109] ss:$8 sm:$0x0] %vm745, %v1049
  %s1112 = scalar_lea.vmem %s7, 337
  %1113 = vst.msk [vmem:[%s1112] ss:$8 sm:$0x7] %vm745, %v1051
  %1114 = vst.msk [vmem:[%s1112] ss:$8 sm:$0x0] %vm745, %v1051
  %s1115 = scalar_lea.vmem %s7, 361
  %1116 = vst.msk [vmem:[%s1115] ss:$8 sm:$0x7] %vm745, %v1053
  %1117 = vst.msk [vmem:[%s1115] ss:$8 sm:$0x0] %vm745, %v1053
  %s1118 = scalar_lea.vmem %s3, 2
  %v1119 = vld [vmem:[%s1118] ss:$8 sm:$0x3]
  %v1121 = vlaneseq
  %v1122 = vshrl.u32 %v1121, 7
  %v1123 = vsub.s32 0, %v1122
  %v1124 = vrot.slane %v1119, %v1123
  %v1125 = vlaneseq
  %v1126 = vshrl.u32 %v1125, 7
  %v1127 = vsub.s32 1, %v1126
  %v1128 = vrot.slane %v1119, %v1127
  %v1131 = vadd.f32 %v97, %v1124
  %v1132 = vadd.f32 %v99, %v1128
  %v1133 = vadd.f32 %v101, %v1124
  %v1134 = vadd.f32 %v103, %v1128
  %v1135 = vmul.f32 %v192, %v1131
  %v1136 = vmul.f32 %v192, %v1132
  %v1137 = vmul.f32 %v197, %v1133
  %v1138 = vmul.f32 %v197, %v1134
  %v1139 = vadd.f32 %v1135, %v207
  %v1140 = vadd.f32 %v1136, %v211
  %v1141 = vadd.f32 %v1137, %v207
  %v1142 = vadd.f32 %v1138, %v211
  %v1143 = vmax.f32 %v1139, 0.0
  %v1144 = vmax.f32 %v1140, 0.0
  %v1145 = vmax.f32 %v1141, 0.0
  %v1146 = vmax.f32 %v1142, 0.0
  %v1147 = vpack.c.bf16 %v1145, %v1143
  %v1148 = vpack.c.bf16 %v1146, %v1144
  %1149 = vmatprep.subr.bf16.mxu0 %v401
  %1150 = vmatpush1.bf16.msra.mxu0 %v400
  %1151 = vmatprep.subr.bf16.mxu0 %v404
  %1152 = vmatpush1.bf16.msra.mxu0 %v403
  %1153 = vmatprep.subr.bf16.mxu0 %v407
  %1154 = vmatpush1.bf16.msra.mxu0 %v406
  %1155 = vmatprep.subr.bf16.mxu0 %v410
  %1156 = vmatpush1.bf16.msra.mxu0 %v409
  %1157 = vmatprep.subr.bf16.mxu0 %v413
  %1158 = vmatpush1.bf16.msra.mxu0 %v412
  %1159 = vmatprep.subr.bf16.mxu0 %v416
  %1160 = vmatpush1.bf16.msra.mxu0 %v415
  %1161 = vmatprep.subr.bf16.mxu0 %v419
  %1162 = vmatpush1.bf16.msra.mxu0 %v418
  %1163 = vmatprep.subr.bf16.mxu0 %v422
  %1164 = vmatpush1.bf16.msra.mxu0 %v421
  %1165 = vmatprep.subr.bf16.mxu0 %v425
  %1166 = vmatpush1.bf16.msra.mxu0 %v424
  %1167 = vmatprep.subr.bf16.mxu0 %v428
  %1168 = vmatpush1.bf16.msra.mxu0 %v427
  %1169 = vmatprep.subr.bf16.mxu0 %v431
  %1170 = vmatpush1.bf16.msra.mxu0 %v430
  %1171 = vmatprep.subr.bf16.mxu0 %v434
  %1172 = vmatpush1.bf16.msra.mxu0 %v433
  %1173 = vmatprep.subr.bf16.mxu0 %v437
  %1174 = vmatpush1.bf16.msra.mxu0 %v436
  %1175 = vmatprep.subr.bf16.mxu0 %v440
  %1176 = vmatpush1.bf16.msra.mxu0 %v439
  %1177 = vmatprep.subr.bf16.mxu0 %v443
  %1178 = vmatpush1.bf16.msra.mxu0 %v442
  %1179 = vmatprep.subr.bf16.mxu0 %v446
  %1180 = vmatpush1.bf16.msra.mxu0 %v445
  %1181 = vmatprep.mubr.bf16.mxu0 %v1148
  %1182 = vmatmul.mubr.bf16.gmra.mrb[0].mxu0 %v1147
  %v1183 = vpop.f32.mrb[0].mxu0
  %v1184 = vadd.f32 %v228, %v1183
  %v1185 = vpop.f32.mrb[0].mxu0
  %v1186 = vadd.f32 %v232, %v1185
  %v1187 = vpop.f32.mrb[0].mxu0
  %v1188 = vadd.f32 %v228, %v1187
  %v1189 = vpop.f32.mrb[0].mxu0
  %v1190 = vadd.f32 %v232, %v1189
  %1191 = vdwg.mxu0
  %1192 = vmatprep.subr.bf16.mxu0 0
  %1193 = vmatpush1.bf16.msra.mxu0 %v402
  %1194 = vmatprep.subr.bf16.mxu0 0
  %1195 = vmatpush1.bf16.msra.mxu0 %v405
  %1196 = vmatprep.subr.bf16.mxu0 0
  %1197 = vmatpush1.bf16.msra.mxu0 %v408
  %1198 = vmatprep.subr.bf16.mxu0 0
  %1199 = vmatpush1.bf16.msra.mxu0 %v411
  %1200 = vmatprep.subr.bf16.mxu0 0
  %1201 = vmatpush1.bf16.msra.mxu0 %v414
  %1202 = vmatprep.subr.bf16.mxu0 0
  %1203 = vmatpush1.bf16.msra.mxu0 %v417
  %1204 = vmatprep.subr.bf16.mxu0 0
  %1205 = vmatpush1.bf16.msra.mxu0 %v420
  %1206 = vmatprep.subr.bf16.mxu0 0
  %1207 = vmatpush1.bf16.msra.mxu0 %v423
  %1208 = vmatprep.subr.bf16.mxu0 0
  %1209 = vmatpush1.bf16.msra.mxu0 %v426
  %1210 = vmatprep.subr.bf16.mxu0 0
  %1211 = vmatpush1.bf16.msra.mxu0 %v429
  %1212 = vmatprep.subr.bf16.mxu0 0
  %1213 = vmatpush1.bf16.msra.mxu0 %v432
  %1214 = vmatprep.subr.bf16.mxu0 0
  %1215 = vmatpush1.bf16.msra.mxu0 %v435
  %1216 = vmatprep.subr.bf16.mxu0 0
  %1217 = vmatpush1.bf16.msra.mxu0 %v438
  %1218 = vmatprep.subr.bf16.mxu0 0
  %1219 = vmatpush1.bf16.msra.mxu0 %v441
  %1220 = vmatprep.subr.bf16.mxu0 0
  %1221 = vmatpush1.bf16.msra.mxu0 %v444
  %1222 = vmatprep.subr.bf16.mxu0 0
  %1223 = vmatpush1.bf16.msra.mxu0 %v447
  %1224 = vmatprep.mubr.bf16.mxu0 %v1148
  %1225 = vmatmul.mubr.bf16.gmra.mrb[0].mxu0 %v1147
  %v1226 = vpop.f32.mrb[0].mxu0
  %v1227 = vadd.f32 %v236, %v1226
  %v1228 = vpop.f32.mrb[0].mxu0
  %v1229 = vpop.f32.mrb[0].mxu0
  %v1230 = vadd.f32 %v236, %v1229
  %v1231 = vpop.f32.mrb[0].mxu0
  %1232 = vdwg.mxu0
  %v1233 = vmax.f32 %v1184, 0.0
  %v1234 = vmax.f32 %v1186, 0.0
  %v1235 = vmax.f32 %v1227, 0.0
  %v1236 = vmax.f32 %v1188, 0.0
  %v1237 = vmax.f32 %v1190, 0.0
  %v1238 = vmax.f32 %v1230, 0.0
  %v1245 = vcombine.low %v1233, %v1234
  %v1246 = vcombine.high %v1233, %v1234
  %v1247 = vcombine.high %v1235, %v1235
  %v1249 = vunpack.c.l.s4 1966171168
  %v1250 = vunpack.c.0.s8 %v1249
  %v1251 = vlaneseq
  %v1252 = vshrl.u32 %v1251, 7
  %v1253 = vsub.s32 %v1250, %v1252
  %v1254 = vrot.slane %v1245, %v1253
  %v1256 = vunpack.c.l.s4 1966171168
  %v1257 = vunpack.c.0.s8 %v1256
  %v1258 = vlaneseq
  %v1259 = vshrl.u32 %v1258, 7
  %v1260 = vsub.s32 %v1257, %v1259
  %v1261 = vrot.slane %v1246, %v1260
  %v1263 = vunpack.c.l.s4 1966171168
  %v1264 = vunpack.c.0.s8 %v1263
  %v1265 = vlaneseq
  %v1266 = vshrl.u32 %v1265, 7
  %v1267 = vsub.s32 %v1264, %v1266
  %v1268 = vrot.slane %v1235, %v1267
  %v1270 = vunpack.c.l.s4 1966171168
  %v1271 = vunpack.c.0.s8 %v1270
  %v1272 = vlaneseq
  %v1273 = vshrl.u32 %v1272, 7
  %v1274 = vsub.s32 %v1271, %v1273
  %v1275 = vrot.slane %v1247, %v1274
  %v1276 = vcombine.low %v1254, %v1268
  %v1277 = vcombine.high %v1254, %v1268
  %v1278 = vcombine.low %v1261, %v1275
  %v1279 = vcombine.high %v1261, %v1275
  %v1281 = vunpack.c.l.s4 1966171168
  %v1282 = vunpack.c.0.s8 %v1281
  %v1283 = vlaneseq
  %v1284 = vshrl.u32 %v1283, 7
  %v1285 = vsub.s32 %v1282, %v1284
  %v1286 = vrot.slane %v1276, %v1285
  %v1288 = vunpack.c.l.s4 1966171168
  %v1289 = vunpack.c.0.s8 %v1288
  %v1290 = vlaneseq
  %v1291 = vshrl.u32 %v1290, 7
  %v1292 = vsub.s32 %v1289, %v1291
  %v1293 = vrot.slane %v1278, %v1292
  %v1295 = vunpack.c.l.s4 1966171168
  %v1296 = vunpack.c.0.s8 %v1295
  %v1297 = vlaneseq
  %v1298 = vshrl.u32 %v1297, 7
  %v1299 = vsub.s32 %v1296, %v1298
  %v1300 = vrot.slane %v1277, %v1299
  %v1302 = vunpack.c.l.s4 1966171168
  %v1303 = vunpack.c.0.s8 %v1302
  %v1304 = vlaneseq
  %v1305 = vshrl.u32 %v1304, 7
  %v1306 = vsub.s32 %v1303, %v1305
  %v1307 = vrot.slane %v1279, %v1306
  %v1308 = vcombine.high %v1286, %v1286
  %v1309 = vcombine.high %v1293, %v1293
  %v1310 = vcombine.high %v1300, %v1300
  %v1311 = vcombine.high %v1307, %v1307
  %v1312 = vcombine.low %v1236, %v1237
  %v1313 = vcombine.high %v1236, %v1237
  %v1314 = vcombine.high %v1238, %v1238
  %v1316 = vunpack.c.l.s4 1966171168
  %v1317 = vunpack.c.0.s8 %v1316
  %v1318 = vlaneseq
  %v1319 = vshrl.u32 %v1318, 7
  %v1320 = vsub.s32 %v1317, %v1319
  %v1321 = vrot.slane %v1312, %v1320
  %v1323 = vunpack.c.l.s4 1966171168
  %v1324 = vunpack.c.0.s8 %v1323
  %v1325 = vlaneseq
  %v1326 = vshrl.u32 %v1325, 7
  %v1327 = vsub.s32 %v1324, %v1326
  %v1328 = vrot.slane %v1313, %v1327
  %v1330 = vunpack.c.l.s4 1966171168
  %v1331 = vunpack.c.0.s8 %v1330
  %v1332 = vlaneseq
  %v1333 = vshrl.u32 %v1332, 7
  %v1334 = vsub.s32 %v1331, %v1333
  %v1335 = vrot.slane %v1238, %v1334
  %v1337 = vunpack.c.l.s4 1966171168
  %v1338 = vunpack.c.0.s8 %v1337
  %v1339 = vlaneseq
  %v1340 = vshrl.u32 %v1339, 7
  %v1341 = vsub.s32 %v1338, %v1340
  %v1342 = vrot.slane %v1314, %v1341
  %v1343 = vcombine.low %v1321, %v1335
  %v1344 = vcombine.high %v1321, %v1335
  %v1345 = vcombine.low %v1328, %v1342
  %v1346 = vcombine.high %v1328, %v1342
  %v1348 = vunpack.c.l.s4 1966171168
  %v1349 = vunpack.c.0.s8 %v1348
  %v1350 = vlaneseq
  %v1351 = vshrl.u32 %v1350, 7
  %v1352 = vsub.s32 %v1349, %v1351
  %v1353 = vrot.slane %v1343, %v1352
  %v1355 = vunpack.c.l.s4 1966171168
  %v1356 = vunpack.c.0.s8 %v1355
  %v1357 = vlaneseq
  %v1358 = vshrl.u32 %v1357, 7
  %v1359 = vsub.s32 %v1356, %v1358
  %v1360 = vrot.slane %v1345, %v1359
  %v1362 = vunpack.c.l.s4 1966171168
  %v1363 = vunpack.c.0.s8 %v1362
  %v1364 = vlaneseq
  %v1365 = vshrl.u32 %v1364, 7
  %v1366 = vsub.s32 %v1363, %v1365
  %v1367 = vrot.slane %v1344, %v1366
  %v1369 = vunpack.c.l.s4 1966171168
  %v1370 = vunpack.c.0.s8 %v1369
  %v1371 = vlaneseq
  %v1372 = vshrl.u32 %v1371, 7
  %v1373 = vsub.s32 %v1370, %v1372
  %v1374 = vrot.slane %v1346, %v1373
  %v1375 = vcombine.high %v1353, %v1353
  %v1376 = vcombine.high %v1360, %v1360
  %v1377 = vcombine.high %v1367, %v1367
  %v1378 = vcombine.high %v1374, %v1374
  %s1395 = scalar_lea.vmem %s7, 2
  %1396 = vst.msk [vmem:[%s1395] ss:$8 sm:$0x7] %vm745, %v1286
  %1397 = vst.msk [vmem:[%s1395] ss:$8 sm:$0x0] %vm745, %v1286
  %s1398 = scalar_lea.vmem %s7, 26
  %1399 = vst.msk [vmem:[%s1398] ss:$8 sm:$0x7] %vm745, %v1300
  %1400 = vst.msk [vmem:[%s1398] ss:$8 sm:$0x0] %vm745, %v1300
  %s1401 = scalar_lea.vmem %s7, 50
  %1402 = vst.msk [vmem:[%s1401] ss:$8 sm:$0x7] %vm745, %v1308
  %1403 = vst.msk [vmem:[%s1401] ss:$8 sm:$0x0] %vm745, %v1308
  %s1404 = scalar_lea.vmem %s7, 74
  %1405 = vst.msk [vmem:[%s1404] ss:$8 sm:$0x7] %vm745, %v1310
  %1406 = vst.msk [vmem:[%s1404] ss:$8 sm:$0x0] %vm745, %v1310
  %s1407 = scalar_lea.vmem %s7, 98
  %1408 = vst.msk [vmem:[%s1407] ss:$8 sm:$0x7] %vm745, %v1293
  %1409 = vst.msk [vmem:[%s1407] ss:$8 sm:$0x0] %vm745, %v1293
  %s1410 = scalar_lea.vmem %s7, 122
  %1411 = vst.msk [vmem:[%s1410] ss:$8 sm:$0x7] %vm745, %v1307
  %1412 = vst.msk [vmem:[%s1410] ss:$8 sm:$0x0] %vm745, %v1307
  %s1413 = scalar_lea.vmem %s7, 146
  %1414 = vst.msk [vmem:[%s1413] ss:$8 sm:$0x7] %vm745, %v1309
  %1415 = vst.msk [vmem:[%s1413] ss:$8 sm:$0x0] %vm745, %v1309
  %s1416 = scalar_lea.vmem %s7, 170
  %1417 = vst.msk [vmem:[%s1416] ss:$8 sm:$0x7] %vm745, %v1311
  %1418 = vst.msk [vmem:[%s1416] ss:$8 sm:$0x0] %vm745, %v1311
  %s1419 = scalar_lea.vmem %s7, 194
  %1420 = vst.msk [vmem:[%s1419] ss:$8 sm:$0x7] %vm745, %v1353
  %1421 = vst.msk [vmem:[%s1419] ss:$8 sm:$0x0] %vm745, %v1353
  %s1422 = scalar_lea.vmem %s7, 218
  %1423 = vst.msk [vmem:[%s1422] ss:$8 sm:$0x7] %vm745, %v1367
  %1424 = vst.msk [vmem:[%s1422] ss:$8 sm:$0x0] %vm745, %v1367
  %s1425 = scalar_lea.vmem %s7, 242
  %1426 = vst.msk [vmem:[%s1425] ss:$8 sm:$0x7] %vm745, %v1375
  %1427 = vst.msk [vmem:[%s1425] ss:$8 sm:$0x0] %vm745, %v1375
  %s1428 = scalar_lea.vmem %s7, 266
  %1429 = vst.msk [vmem:[%s1428] ss:$8 sm:$0x7] %vm745, %v1377
  %1430 = vst.msk [vmem:[%s1428] ss:$8 sm:$0x0] %vm745, %v1377
  %s1431 = scalar_lea.vmem %s7, 290
  %1432 = vst.msk [vmem:[%s1431] ss:$8 sm:$0x7] %vm745, %v1360
  %1433 = vst.msk [vmem:[%s1431] ss:$8 sm:$0x0] %vm745, %v1360
  %s1434 = scalar_lea.vmem %s7, 314
  %1435 = vst.msk [vmem:[%s1434] ss:$8 sm:$0x7] %vm745, %v1374
  %1436 = vst.msk [vmem:[%s1434] ss:$8 sm:$0x0] %vm745, %v1374
  %s1437 = scalar_lea.vmem %s7, 338
  %1438 = vst.msk [vmem:[%s1437] ss:$8 sm:$0x7] %vm745, %v1376
  %1439 = vst.msk [vmem:[%s1437] ss:$8 sm:$0x0] %vm745, %v1376
  %s1440 = scalar_lea.vmem %s7, 362
  %1441 = vst.msk [vmem:[%s1440] ss:$8 sm:$0x7] %vm745, %v1378
  %1442 = vst.msk [vmem:[%s1440] ss:$8 sm:$0x0] %vm745, %v1378
  %s1443 = scalar_lea.vmem %s3, 3
  %v1444 = vld [vmem:[%s1443] ss:$8 sm:$0x3]
  %v1446 = vlaneseq
  %v1447 = vshrl.u32 %v1446, 7
  %v1448 = vsub.s32 0, %v1447
  %v1449 = vrot.slane %v1444, %v1448
  %v1450 = vlaneseq
  %v1451 = vshrl.u32 %v1450, 7
  %v1452 = vsub.s32 1, %v1451
  %v1453 = vrot.slane %v1444, %v1452
  %v1456 = vadd.f32 %v97, %v1449
  %v1457 = vadd.f32 %v99, %v1453
  %v1458 = vadd.f32 %v101, %v1449
  %v1459 = vadd.f32 %v103, %v1453
  %v1460 = vmul.f32 %v192, %v1456
  %v1461 = vmul.f32 %v192, %v1457
  %v1462 = vmul.f32 %v197, %v1458
  %v1463 = vmul.f32 %v197, %v1459
  %v1464 = vadd.f32 %v1460, %v207
  %v1465 = vadd.f32 %v1461, %v211
  %v1466 = vadd.f32 %v1462, %v207
  %v1467 = vadd.f32 %v1463, %v211
  %v1468 = vmax.f32 %v1464, 0.0
  %v1469 = vmax.f32 %v1465, 0.0
  %v1470 = vmax.f32 %v1466, 0.0
  %v1471 = vmax.f32 %v1467, 0.0
  %v1472 = vpack.c.bf16 %v1470, %v1468
  %v1473 = vpack.c.bf16 %v1471, %v1469
  %1474 = vmatprep.subr.bf16.mxu0 %v401
  %1475 = vmatpush1.bf16.msra.mxu0 %v400
  %1476 = vmatprep.subr.bf16.mxu0 %v404
  %1477 = vmatpush1.bf16.msra.mxu0 %v403
  %1478 = vmatprep.subr.bf16.mxu0 %v407
  %1479 = vmatpush1.bf16.msra.mxu0 %v406
  %1480 = vmatprep.subr.bf16.mxu0 %v410
  %1481 = vmatpush1.bf16.msra.mxu0 %v409
  %1482 = vmatprep.subr.bf16.mxu0 %v413
  %1483 = vmatpush1.bf16.msra.mxu0 %v412
  %1484 = vmatprep.subr.bf16.mxu0 %v416
  %1485 = vmatpush1.bf16.msra.mxu0 %v415
  %1486 = vmatprep.subr.bf16.mxu0 %v419
  %1487 = vmatpush1.bf16.msra.mxu0 %v418
  %1488 = vmatprep.subr.bf16.mxu0 %v422
  %1489 = vmatpush1.bf16.msra.mxu0 %v421
  %1490 = vmatprep.subr.bf16.mxu0 %v425
  %1491 = vmatpush1.bf16.msra.mxu0 %v424
  %1492 = vmatprep.subr.bf16.mxu0 %v428
  %1493 = vmatpush1.bf16.msra.mxu0 %v427
  %1494 = vmatprep.subr.bf16.mxu0 %v431
  %1495 = vmatpush1.bf16.msra.mxu0 %v430
  %1496 = vmatprep.subr.bf16.mxu0 %v434
  %1497 = vmatpush1.bf16.msra.mxu0 %v433
  %1498 = vmatprep.subr.bf16.mxu0 %v437
  %1499 = vmatpush1.bf16.msra.mxu0 %v436
  %1500 = vmatprep.subr.bf16.mxu0 %v440
  %1501 = vmatpush1.bf16.msra.mxu0 %v439
  %1502 = vmatprep.subr.bf16.mxu0 %v443
  %1503 = vmatpush1.bf16.msra.mxu0 %v442
  %1504 = vmatprep.subr.bf16.mxu0 %v446
  %1505 = vmatpush1.bf16.msra.mxu0 %v445
  %1506 = vmatprep.mubr.bf16.mxu0 %v1473
  %1507 = vmatmul.mubr.bf16.gmra.mrb[0].mxu0 %v1472
  %v1508 = vpop.f32.mrb[0].mxu0
  %v1509 = vadd.f32 %v228, %v1508
  %v1510 = vpop.f32.mrb[0].mxu0
  %v1511 = vadd.f32 %v232, %v1510
  %v1512 = vpop.f32.mrb[0].mxu0
  %v1513 = vadd.f32 %v228, %v1512
  %v1514 = vpop.f32.mrb[0].mxu0
  %v1515 = vadd.f32 %v232, %v1514
  %1516 = vdwg.mxu0
  %1517 = vmatprep.subr.bf16.mxu0 0
  %1518 = vmatpush1.bf16.msra.mxu0 %v402
  %1519 = vmatprep.subr.bf16.mxu0 0
  %1520 = vmatpush1.bf16.msra.mxu0 %v405
  %1521 = vmatprep.subr.bf16.mxu0 0
  %1522 = vmatpush1.bf16.msra.mxu0 %v408
  %1523 = vmatprep.subr.bf16.mxu0 0
  %1524 = vmatpush1.bf16.msra.mxu0 %v411
  %1525 = vmatprep.subr.bf16.mxu0 0
  %1526 = vmatpush1.bf16.msra.mxu0 %v414
  %1527 = vmatprep.subr.bf16.mxu0 0
  %1528 = vmatpush1.bf16.msra.mxu0 %v417
  %1529 = vmatprep.subr.bf16.mxu0 0
  %1530 = vmatpush1.bf16.msra.mxu0 %v420
  %1531 = vmatprep.subr.bf16.mxu0 0
  %1532 = vmatpush1.bf16.msra.mxu0 %v423
  %1533 = vmatprep.subr.bf16.mxu0 0
  %1534 = vmatpush1.bf16.msra.mxu0 %v426
  %1535 = vmatprep.subr.bf16.mxu0 0
  %1536 = vmatpush1.bf16.msra.mxu0 %v429
  %1537 = vmatprep.subr.bf16.mxu0 0
  %1538 = vmatpush1.bf16.msra.mxu0 %v432
  %1539 = vmatprep.subr.bf16.mxu0 0
  %1540 = vmatpush1.bf16.msra.mxu0 %v435
  %1541 = vmatprep.subr.bf16.mxu0 0
  %1542 = vmatpush1.bf16.msra.mxu0 %v438
  %1543 = vmatprep.subr.bf16.mxu0 0
  %1544 = vmatpush1.bf16.msra.mxu0 %v441
  %1545 = vmatprep.subr.bf16.mxu0 0
  %1546 = vmatpush1.bf16.msra.mxu0 %v444
  %1547 = vmatprep.subr.bf16.mxu0 0
  %1548 = vmatpush1.bf16.msra.mxu0 %v447
  %1549 = vmatprep.mubr.bf16.mxu0 %v1473
  %1550 = vmatmul.mubr.bf16.gmra.mrb[0].mxu0 %v1472
  %v1551 = vpop.f32.mrb[0].mxu0
  %v1552 = vadd.f32 %v236, %v1551
  %v1553 = vpop.f32.mrb[0].mxu0
  %v1554 = vpop.f32.mrb[0].mxu0
  %v1555 = vadd.f32 %v236, %v1554
  %v1556 = vpop.f32.mrb[0].mxu0
  %1557 = vdwg.mxu0
  %v1558 = vmax.f32 %v1509, 0.0
  %v1559 = vmax.f32 %v1511, 0.0
  %v1560 = vmax.f32 %v1552, 0.0
  %v1561 = vmax.f32 %v1513, 0.0
  %v1562 = vmax.f32 %v1515, 0.0
  %v1563 = vmax.f32 %v1555, 0.0
  %v1570 = vcombine.low %v1558, %v1559
  %v1571 = vcombine.high %v1558, %v1559
  %v1572 = vcombine.high %v1560, %v1560
  %v1574 = vunpack.c.l.s4 1966171168
  %v1575 = vunpack.c.0.s8 %v1574
  %v1576 = vlaneseq
  %v1577 = vshrl.u32 %v1576, 7
  %v1578 = vsub.s32 %v1575, %v1577
  %v1579 = vrot.slane %v1570, %v1578
  %v1581 = vunpack.c.l.s4 1966171168
  %v1582 = vunpack.c.0.s8 %v1581
  %v1583 = vlaneseq
  %v1584 = vshrl.u32 %v1583, 7
  %v1585 = vsub.s32 %v1582, %v1584
  %v1586 = vrot.slane %v1571, %v1585
  %v1588 = vunpack.c.l.s4 1966171168
  %v1589 = vunpack.c.0.s8 %v1588
  %v1590 = vlaneseq
  %v1591 = vshrl.u32 %v1590, 7
  %v1592 = vsub.s32 %v1589, %v1591
  %v1593 = vrot.slane %v1560, %v1592
  %v1595 = vunpack.c.l.s4 1966171168
  %v1596 = vunpack.c.0.s8 %v1595
  %v1597 = vlaneseq
  %v1598 = vshrl.u32 %v1597, 7
  %v1599 = vsub.s32 %v1596, %v1598
  %v1600 = vrot.slane %v1572, %v1599
  %v1601 = vcombine.low %v1579, %v1593
  %v1602 = vcombine.high %v1579, %v1593
  %v1603 = vcombine.low %v1586, %v1600
  %v1604 = vcombine.high %v1586, %v1600
  %v1606 = vunpack.c.l.s4 1966171168
  %v1607 = vunpack.c.0.s8 %v1606
  %v1608 = vlaneseq
  %v1609 = vshrl.u32 %v1608, 7
  %v1610 = vsub.s32 %v1607, %v1609
  %v1611 = vrot.slane %v1601, %v1610
  %v1613 = vunpack.c.l.s4 1966171168
  %v1614 = vunpack.c.0.s8 %v1613
  %v1615 = vlaneseq
  %v1616 = vshrl.u32 %v1615, 7
  %v1617 = vsub.s32 %v1614, %v1616
  %v1618 = vrot.slane %v1603, %v1617
  %v1620 = vunpack.c.l.s4 1966171168
  %v1621 = vunpack.c.0.s8 %v1620
  %v1622 = vlaneseq
  %v1623 = vshrl.u32 %v1622, 7
  %v1624 = vsub.s32 %v1621, %v1623
  %v1625 = vrot.slane %v1602, %v1624
  %v1627 = vunpack.c.l.s4 1966171168
  %v1628 = vunpack.c.0.s8 %v1627
  %v1629 = vlaneseq
  %v1630 = vshrl.u32 %v1629, 7
  %v1631 = vsub.s32 %v1628, %v1630
  %v1632 = vrot.slane %v1604, %v1631
  %v1633 = vcombine.high %v1611, %v1611
  %v1634 = vcombine.high %v1618, %v1618
  %v1635 = vcombine.high %v1625, %v1625
  %v1636 = vcombine.high %v1632, %v1632
  %v1637 = vcombine.low %v1561, %v1562
  %v1638 = vcombine.high %v1561, %v1562
  %v1639 = vcombine.high %v1563, %v1563
  %v1641 = vunpack.c.l.s4 1966171168
  %v1642 = vunpack.c.0.s8 %v1641
  %v1643 = vlaneseq
  %v1644 = vshrl.u32 %v1643, 7
  %v1645 = vsub.s32 %v1642, %v1644
  %v1646 = vrot.slane %v1637, %v1645
  %v1648 = vunpack.c.l.s4 1966171168
  %v1649 = vunpack.c.0.s8 %v1648
  %v1650 = vlaneseq
  %v1651 = vshrl.u32 %v1650, 7
  %v1652 = vsub.s32 %v1649, %v1651
  %v1653 = vrot.slane %v1638, %v1652
  %v1655 = vunpack.c.l.s4 1966171168
  %v1656 = vunpack.c.0.s8 %v1655
  %v1657 = vlaneseq
  %v1658 = vshrl.u32 %v1657, 7
  %v1659 = vsub.s32 %v1656, %v1658
  %v1660 = vrot.slane %v1563, %v1659
  %v1662 = vunpack.c.l.s4 1966171168
  %v1663 = vunpack.c.0.s8 %v1662
  %v1664 = vlaneseq
  %v1665 = vshrl.u32 %v1664, 7
  %v1666 = vsub.s32 %v1663, %v1665
  %v1667 = vrot.slane %v1639, %v1666
  %v1668 = vcombine.low %v1646, %v1660
  %v1669 = vcombine.high %v1646, %v1660
  %v1670 = vcombine.low %v1653, %v1667
  %v1671 = vcombine.high %v1653, %v1667
  %v1673 = vunpack.c.l.s4 1966171168
  %v1674 = vunpack.c.0.s8 %v1673
  %v1675 = vlaneseq
  %v1676 = vshrl.u32 %v1675, 7
  %v1677 = vsub.s32 %v1674, %v1676
  %v1678 = vrot.slane %v1668, %v1677
  %v1680 = vunpack.c.l.s4 1966171168
  %v1681 = vunpack.c.0.s8 %v1680
  %v1682 = vlaneseq
  %v1683 = vshrl.u32 %v1682, 7
  %v1684 = vsub.s32 %v1681, %v1683
  %v1685 = vrot.slane %v1670, %v1684
  %v1687 = vunpack.c.l.s4 1966171168
  %v1688 = vunpack.c.0.s8 %v1687
  %v1689 = vlaneseq
  %v1690 = vshrl.u32 %v1689, 7
  %v1691 = vsub.s32 %v1688, %v1690
  %v1692 = vrot.slane %v1669, %v1691
  %v1694 = vunpack.c.l.s4 1966171168
  %v1695 = vunpack.c.0.s8 %v1694
  %v1696 = vlaneseq
  %v1697 = vshrl.u32 %v1696, 7
  %v1698 = vsub.s32 %v1695, %v1697
  %v1699 = vrot.slane %v1671, %v1698
  %v1700 = vcombine.high %v1678, %v1678
  %v1701 = vcombine.high %v1685, %v1685
  %v1702 = vcombine.high %v1692, %v1692
  %v1703 = vcombine.high %v1699, %v1699
  %s1720 = scalar_lea.vmem %s7, 3
  %1721 = vst.msk [vmem:[%s1720] ss:$8 sm:$0x7] %vm745, %v1611
  %1722 = vst.msk [vmem:[%s1720] ss:$8 sm:$0x0] %vm745, %v1611
  %s1723 = scalar_lea.vmem %s7, 27
  %1724 = vst.msk [vmem:[%s1723] ss:$8 sm:$0x7] %vm745, %v1625
  %1725 = vst.msk [vmem:[%s1723] ss:$8 sm:$0x0] %vm745, %v1625
  %s1726 = scalar_lea.vmem %s7, 51
  %1727 = vst.msk [vmem:[%s1726] ss:$8 sm:$0x7] %vm745, %v1633
  %1728 = vst.msk [vmem:[%s1726] ss:$8 sm:$0x0] %vm745, %v1633
  %s1729 = scalar_lea.vmem %s7, 75
  %1730 = vst.msk [vmem:[%s1729] ss:$8 sm:$0x7] %vm745, %v1635
  %1731 = vst.msk [vmem:[%s1729] ss:$8 sm:$0x0] %vm745, %v1635
  %s1732 = scalar_lea.vmem %s7, 99
  %1733 = vst.msk [vmem:[%s1732] ss:$8 sm:$0x7] %vm745, %v1618
  %1734 = vst.msk [vmem:[%s1732] ss:$8 sm:$0x0] %vm745, %v1618
  %s1735 = scalar_lea.vmem %s7, 123
  %1736 = vst.msk [vmem:[%s1735] ss:$8 sm:$0x7] %vm745, %v1632
  %1737 = vst.msk [vmem:[%s1735] ss:$8 sm:$0x0] %vm745, %v1632
  %s1738 = scalar_lea.vmem %s7, 147
  %1739 = vst.msk [vmem:[%s1738] ss:$8 sm:$0x7] %vm745, %v1634
  %1740 = vst.msk [vmem:[%s1738] ss:$8 sm:$0x0] %vm745, %v1634
  %s1741 = scalar_lea.vmem %s7, 171
  %1742 = vst.msk [vmem:[%s1741] ss:$8 sm:$0x7] %vm745, %v1636
  %1743 = vst.msk [vmem:[%s1741] ss:$8 sm:$0x0] %vm745, %v1636
  %s1744 = scalar_lea.vmem %s7, 195
  %1745 = vst.msk [vmem:[%s1744] ss:$8 sm:$0x7] %vm745, %v1678
  %1746 = vst.msk [vmem:[%s1744] ss:$8 sm:$0x0] %vm745, %v1678
  %s1747 = scalar_lea.vmem %s7, 219
  %1748 = vst.msk [vmem:[%s1747] ss:$8 sm:$0x7] %vm745, %v1692
  %1749 = vst.msk [vmem:[%s1747] ss:$8 sm:$0x0] %vm745, %v1692
  %s1750 = scalar_lea.vmem %s7, 243
  %1751 = vst.msk [vmem:[%s1750] ss:$8 sm:$0x7] %vm745, %v1700
  %1752 = vst.msk [vmem:[%s1750] ss:$8 sm:$0x0] %vm745, %v1700
  %s1753 = scalar_lea.vmem %s7, 267
  %1754 = vst.msk [vmem:[%s1753] ss:$8 sm:$0x7] %vm745, %v1702
  %1755 = vst.msk [vmem:[%s1753] ss:$8 sm:$0x0] %vm745, %v1702
  %s1756 = scalar_lea.vmem %s7, 291
  %1757 = vst.msk [vmem:[%s1756] ss:$8 sm:$0x7] %vm745, %v1685
  %1758 = vst.msk [vmem:[%s1756] ss:$8 sm:$0x0] %vm745, %v1685
  %s1759 = scalar_lea.vmem %s7, 315
  %1760 = vst.msk [vmem:[%s1759] ss:$8 sm:$0x7] %vm745, %v1699
  %1761 = vst.msk [vmem:[%s1759] ss:$8 sm:$0x0] %vm745, %v1699
  %s1762 = scalar_lea.vmem %s7, 339
  %1763 = vst.msk [vmem:[%s1762] ss:$8 sm:$0x7] %vm745, %v1701
  %1764 = vst.msk [vmem:[%s1762] ss:$8 sm:$0x0] %vm745, %v1701
  %s1765 = scalar_lea.vmem %s7, 363
  %1766 = vst.msk [vmem:[%s1765] ss:$8 sm:$0x7] %vm745, %v1703
  %1767 = vst.msk [vmem:[%s1765] ss:$8 sm:$0x0] %vm745, %v1703
  %s1768 = scalar_lea.vmem %s3, 4
  %v1769 = vld [vmem:[%s1768] ss:$8 sm:$0x3]
  %v1771 = vlaneseq
  %v1772 = vshrl.u32 %v1771, 7
  %v1773 = vsub.s32 0, %v1772
  %v1774 = vrot.slane %v1769, %v1773
  %v1775 = vlaneseq
  %v1776 = vshrl.u32 %v1775, 7
  %v1777 = vsub.s32 1, %v1776
  %v1778 = vrot.slane %v1769, %v1777
  %v1781 = vadd.f32 %v97, %v1774
  %v1782 = vadd.f32 %v99, %v1778
  %v1783 = vadd.f32 %v101, %v1774
  %v1784 = vadd.f32 %v103, %v1778
  %v1785 = vmul.f32 %v192, %v1781
  %v1786 = vmul.f32 %v192, %v1782
  %v1787 = vmul.f32 %v197, %v1783
  %v1788 = vmul.f32 %v197, %v1784
  %v1789 = vadd.f32 %v1785, %v207
  %v1790 = vadd.f32 %v1786, %v211
  %v1791 = vadd.f32 %v1787, %v207
  %v1792 = vadd.f32 %v1788, %v211
  %v1793 = vmax.f32 %v1789, 0.0
  %v1794 = vmax.f32 %v1790, 0.0
  %v1795 = vmax.f32 %v1791, 0.0
  %v1796 = vmax.f32 %v1792, 0.0
  %v1797 = vpack.c.bf16 %v1795, %v1793
  %v1798 = vpack.c.bf16 %v1796, %v1794
  %1799 = vmatprep.subr.bf16.mxu0 %v401
  %1800 = vmatpush1.bf16.msra.mxu0 %v400
  %1801 = vmatprep.subr.bf16.mxu0 %v404
  %1802 = vmatpush1.bf16.msra.mxu0 %v403
  %1803 = vmatprep.subr.bf16.mxu0 %v407
  %1804 = vmatpush1.bf16.msra.mxu0 %v406
  %1805 = vmatprep.subr.bf16.mxu0 %v410
  %1806 = vmatpush1.bf16.msra.mxu0 %v409
  %1807 = vmatprep.subr.bf16.mxu0 %v413
  %1808 = vmatpush1.bf16.msra.mxu0 %v412
  %1809 = vmatprep.subr.bf16.mxu0 %v416
  %1810 = vmatpush1.bf16.msra.mxu0 %v415
  %1811 = vmatprep.subr.bf16.mxu0 %v419
  %1812 = vmatpush1.bf16.msra.mxu0 %v418
  %1813 = vmatprep.subr.bf16.mxu0 %v422
  %1814 = vmatpush1.bf16.msra.mxu0 %v421
  %1815 = vmatprep.subr.bf16.mxu0 %v425
  %1816 = vmatpush1.bf16.msra.mxu0 %v424
  %1817 = vmatprep.subr.bf16.mxu0 %v428
  %1818 = vmatpush1.bf16.msra.mxu0 %v427
  %1819 = vmatprep.subr.bf16.mxu0 %v431
  %1820 = vmatpush1.bf16.msra.mxu0 %v430
  %1821 = vmatprep.subr.bf16.mxu0 %v434
  %1822 = vmatpush1.bf16.msra.mxu0 %v433
  %1823 = vmatprep.subr.bf16.mxu0 %v437
  %1824 = vmatpush1.bf16.msra.mxu0 %v436
  %1825 = vmatprep.subr.bf16.mxu0 %v440
  %1826 = vmatpush1.bf16.msra.mxu0 %v439
  %1827 = vmatprep.subr.bf16.mxu0 %v443
  %1828 = vmatpush1.bf16.msra.mxu0 %v442
  %1829 = vmatprep.subr.bf16.mxu0 %v446
  %1830 = vmatpush1.bf16.msra.mxu0 %v445
  %1831 = vmatprep.mubr.bf16.mxu0 %v1798
  %1832 = vmatmul.mubr.bf16.gmra.mrb[0].mxu0 %v1797
  %v1833 = vpop.f32.mrb[0].mxu0
  %v1834 = vadd.f32 %v228, %v1833
  %v1835 = vpop.f32.mrb[0].mxu0
  %v1836 = vadd.f32 %v232, %v1835
  %v1837 = vpop.f32.mrb[0].mxu0
  %v1838 = vadd.f32 %v228, %v1837
  %v1839 = vpop.f32.mrb[0].mxu0
  %v1840 = vadd.f32 %v232, %v1839
  %1841 = vdwg.mxu0
  %1842 = vmatprep.subr.bf16.mxu0 0
  %1843 = vmatpush1.bf16.msra.mxu0 %v402
  %1844 = vmatprep.subr.bf16.mxu0 0
  %1845 = vmatpush1.bf16.msra.mxu0 %v405
  %1846 = vmatprep.subr.bf16.mxu0 0
  %1847 = vmatpush1.bf16.msra.mxu0 %v408
  %1848 = vmatprep.subr.bf16.mxu0 0
  %1849 = vmatpush1.bf16.msra.mxu0 %v411
  %1850 = vmatprep.subr.bf16.mxu0 0
  %1851 = vmatpush1.bf16.msra.mxu0 %v414
  %1852 = vmatprep.subr.bf16.mxu0 0
  %1853 = vmatpush1.bf16.msra.mxu0 %v417
  %1854 = vmatprep.subr.bf16.mxu0 0
  %1855 = vmatpush1.bf16.msra.mxu0 %v420
  %1856 = vmatprep.subr.bf16.mxu0 0
  %1857 = vmatpush1.bf16.msra.mxu0 %v423
  %1858 = vmatprep.subr.bf16.mxu0 0
  %1859 = vmatpush1.bf16.msra.mxu0 %v426
  %1860 = vmatprep.subr.bf16.mxu0 0
  %1861 = vmatpush1.bf16.msra.mxu0 %v429
  %1862 = vmatprep.subr.bf16.mxu0 0
  %1863 = vmatpush1.bf16.msra.mxu0 %v432
  %1864 = vmatprep.subr.bf16.mxu0 0
  %1865 = vmatpush1.bf16.msra.mxu0 %v435
  %1866 = vmatprep.subr.bf16.mxu0 0
  %1867 = vmatpush1.bf16.msra.mxu0 %v438
  %1868 = vmatprep.subr.bf16.mxu0 0
  %1869 = vmatpush1.bf16.msra.mxu0 %v441
  %1870 = vmatprep.subr.bf16.mxu0 0
  %1871 = vmatpush1.bf16.msra.mxu0 %v444
  %1872 = vmatprep.subr.bf16.mxu0 0
  %1873 = vmatpush1.bf16.msra.mxu0 %v447
  %1874 = vmatprep.mubr.bf16.mxu0 %v1798
  %1875 = vmatmul.mubr.bf16.gmra.mrb[0].mxu0 %v1797
  %v1876 = vpop.f32.mrb[0].mxu0
  %v1877 = vadd.f32 %v236, %v1876
  %v1878 = vpop.f32.mrb[0].mxu0
  %v1879 = vpop.f32.mrb[0].mxu0
  %v1880 = vadd.f32 %v236, %v1879
  %v1881 = vpop.f32.mrb[0].mxu0
  %1882 = vdwg.mxu0
  %v1883 = vmax.f32 %v1834, 0.0
  %v1884 = vmax.f32 %v1836, 0.0
  %v1885 = vmax.f32 %v1877, 0.0
  %v1886 = vmax.f32 %v1838, 0.0
  %v1887 = vmax.f32 %v1840, 0.0
  %v1888 = vmax.f32 %v1880, 0.0
  %v1895 = vcombine.low %v1883, %v1884
  %v1896 = vcombine.high %v1883, %v1884
  %v1897 = vcombine.high %v1885, %v1885
  %v1899 = vunpack.c.l.s4 1966171168
  %v1900 = vunpack.c.0.s8 %v1899
  %v1901 = vlaneseq
  %v1902 = vshrl.u32 %v1901, 7
  %v1903 = vsub.s32 %v1900, %v1902
  %v1904 = vrot.slane %v1895, %v1903
  %v1906 = vunpack.c.l.s4 1966171168
  %v1907 = vunpack.c.0.s8 %v1906
  %v1908 = vlaneseq
  %v1909 = vshrl.u32 %v1908, 7
  %v1910 = vsub.s32 %v1907, %v1909
  %v1911 = vrot.slane %v1896, %v1910
  %v1913 = vunpack.c.l.s4 1966171168
  %v1914 = vunpack.c.0.s8 %v1913
  %v1915 = vlaneseq
  %v1916 = vshrl.u32 %v1915, 7
  %v1917 = vsub.s32 %v1914, %v1916
  %v1918 = vrot.slane %v1885, %v1917
  %v1920 = vunpack.c.l.s4 1966171168
  %v1921 = vunpack.c.0.s8 %v1920
  %v1922 = vlaneseq
  %v1923 = vshrl.u32 %v1922, 7
  %v1924 = vsub.s32 %v1921, %v1923
  %v1925 = vrot.slane %v1897, %v1924
  %v1926 = vcombine.low %v1904, %v1918
  %v1927 = vcombine.high %v1904, %v1918
  %v1928 = vcombine.low %v1911, %v1925
  %v1929 = vcombine.high %v1911, %v1925
  %v1931 = vunpack.c.l.s4 1966171168
  %v1932 = vunpack.c.0.s8 %v1931
  %v1933 = vlaneseq
  %v1934 = vshrl.u32 %v1933, 7
  %v1935 = vsub.s32 %v1932, %v1934
  %v1936 = vrot.slane %v1926, %v1935
  %v1938 = vunpack.c.l.s4 1966171168
  %v1939 = vunpack.c.0.s8 %v1938
  %v1940 = vlaneseq
  %v1941 = vshrl.u32 %v1940, 7
  %v1942 = vsub.s32 %v1939, %v1941
  %v1943 = vrot.slane %v1928, %v1942
  %v1945 = vunpack.c.l.s4 1966171168
  %v1946 = vunpack.c.0.s8 %v1945
  %v1947 = vlaneseq
  %v1948 = vshrl.u32 %v1947, 7
  %v1949 = vsub.s32 %v1946, %v1948
  %v1950 = vrot.slane %v1927, %v1949
  %v1952 = vunpack.c.l.s4 1966171168
  %v1953 = vunpack.c.0.s8 %v1952
  %v1954 = vlaneseq
  %v1955 = vshrl.u32 %v1954, 7
  %v1956 = vsub.s32 %v1953, %v1955
  %v1957 = vrot.slane %v1929, %v1956
  %v1958 = vcombine.high %v1936, %v1936
  %v1959 = vcombine.high %v1943, %v1943
  %v1960 = vcombine.high %v1950, %v1950
  %v1961 = vcombine.high %v1957, %v1957
  %v1962 = vcombine.low %v1886, %v1887
  %v1963 = vcombine.high %v1886, %v1887
  %v1964 = vcombine.high %v1888, %v1888
  %v1966 = vunpack.c.l.s4 1966171168
  %v1967 = vunpack.c.0.s8 %v1966
  %v1968 = vlaneseq
  %v1969 = vshrl.u32 %v1968, 7
  %v1970 = vsub.s32 %v1967, %v1969
  %v1971 = vrot.slane %v1962, %v1970
  %v1973 = vunpack.c.l.s4 1966171168
  %v1974 = vunpack.c.0.s8 %v1973
  %v1975 = vlaneseq
  %v1976 = vshrl.u32 %v1975, 7
  %v1977 = vsub.s32 %v1974, %v1976
  %v1978 = vrot.slane %v1963, %v1977
  %v1980 = vunpack.c.l.s4 1966171168
  %v1981 = vunpack.c.0.s8 %v1980
  %v1982 = vlaneseq
  %v1983 = vshrl.u32 %v1982, 7
  %v1984 = vsub.s32 %v1981, %v1983
  %v1985 = vrot.slane %v1888, %v1984
  %v1987 = vunpack.c.l.s4 1966171168
  %v1988 = vunpack.c.0.s8 %v1987
  %v1989 = vlaneseq
  %v1990 = vshrl.u32 %v1989, 7
  %v1991 = vsub.s32 %v1988, %v1990
  %v1992 = vrot.slane %v1964, %v1991
  %v1993 = vcombine.low %v1971, %v1985
  %v1994 = vcombine.high %v1971, %v1985
  %v1995 = vcombine.low %v1978, %v1992
  %v1996 = vcombine.high %v1978, %v1992
  %v1998 = vunpack.c.l.s4 1966171168
  %v1999 = vunpack.c.0.s8 %v1998
  %v2000 = vlaneseq
  %v2001 = vshrl.u32 %v2000, 7
  %v2002 = vsub.s32 %v1999, %v2001
  %v2003 = vrot.slane %v1993, %v2002
  %v2005 = vunpack.c.l.s4 1966171168
  %v2006 = vunpack.c.0.s8 %v2005
  %v2007 = vlaneseq
  %v2008 = vshrl.u32 %v2007, 7
  %v2009 = vsub.s32 %v2006, %v2008
  %v2010 = vrot.slane %v1995, %v2009
  %v2012 = vunpack.c.l.s4 1966171168
  %v2013 = vunpack.c.0.s8 %v2012
  %v2014 = vlaneseq
  %v2015 = vshrl.u32 %v2014, 7
  %v2016 = vsub.s32 %v2013, %v2015
  %v2017 = vrot.slane %v1994, %v2016
  %v2019 = vunpack.c.l.s4 1966171168
  %v2020 = vunpack.c.0.s8 %v2019
  %v2021 = vlaneseq
  %v2022 = vshrl.u32 %v2021, 7
  %v2023 = vsub.s32 %v2020, %v2022
  %v2024 = vrot.slane %v1996, %v2023
  %v2025 = vcombine.high %v2003, %v2003
  %v2026 = vcombine.high %v2010, %v2010
  %v2027 = vcombine.high %v2017, %v2017
  %v2028 = vcombine.high %v2024, %v2024
  %s2045 = scalar_lea.vmem %s7, 4
  %2046 = vst.msk [vmem:[%s2045] ss:$8 sm:$0x7] %vm745, %v1936
  %2047 = vst.msk [vmem:[%s2045] ss:$8 sm:$0x0] %vm745, %v1936
  %s2048 = scalar_lea.vmem %s7, 28
  %2049 = vst.msk [vmem:[%s2048] ss:$8 sm:$0x7] %vm745, %v1950
  %2050 = vst.msk [vmem:[%s2048] ss:$8 sm:$0x0] %vm745, %v1950
  %s2051 = scalar_lea.vmem %s7, 52
  %2052 = vst.msk [vmem:[%s2051] ss:$8 sm:$0x7] %vm745, %v1958
  %2053 = vst.msk [vmem:[%s2051] ss:$8 sm:$0x0] %vm745, %v1958
  %s2054 = scalar_lea.vmem %s7, 76
  %2055 = vst.msk [vmem:[%s2054] ss:$8 sm:$0x7] %vm745, %v1960
  %2056 = vst.msk [vmem:[%s2054] ss:$8 sm:$0x0] %vm745, %v1960
  %s2057 = scalar_lea.vmem %s7, 100
  %2058 = vst.msk [vmem:[%s2057] ss:$8 sm:$0x7] %vm745, %v1943
  %2059 = vst.msk [vmem:[%s2057] ss:$8 sm:$0x0] %vm745, %v1943
  %s2060 = scalar_lea.vmem %s7, 124
  %2061 = vst.msk [vmem:[%s2060] ss:$8 sm:$0x7] %vm745, %v1957
  %2062 = vst.msk [vmem:[%s2060] ss:$8 sm:$0x0] %vm745, %v1957
  %s2063 = scalar_lea.vmem %s7, 148
  %2064 = vst.msk [vmem:[%s2063] ss:$8 sm:$0x7] %vm745, %v1959
  %2065 = vst.msk [vmem:[%s2063] ss:$8 sm:$0x0] %vm745, %v1959
  %s2066 = scalar_lea.vmem %s7, 172
  %2067 = vst.msk [vmem:[%s2066] ss:$8 sm:$0x7] %vm745, %v1961
  %2068 = vst.msk [vmem:[%s2066] ss:$8 sm:$0x0] %vm745, %v1961
  %s2069 = scalar_lea.vmem %s7, 196
  %2070 = vst.msk [vmem:[%s2069] ss:$8 sm:$0x7] %vm745, %v2003
  %2071 = vst.msk [vmem:[%s2069] ss:$8 sm:$0x0] %vm745, %v2003
  %s2072 = scalar_lea.vmem %s7, 220
  %2073 = vst.msk [vmem:[%s2072] ss:$8 sm:$0x7] %vm745, %v2017
  %2074 = vst.msk [vmem:[%s2072] ss:$8 sm:$0x0] %vm745, %v2017
  %s2075 = scalar_lea.vmem %s7, 244
  %2076 = vst.msk [vmem:[%s2075] ss:$8 sm:$0x7] %vm745, %v2025
  %2077 = vst.msk [vmem:[%s2075] ss:$8 sm:$0x0] %vm745, %v2025
  %s2078 = scalar_lea.vmem %s7, 268
  %2079 = vst.msk [vmem:[%s2078] ss:$8 sm:$0x7] %vm745, %v2027
  %2080 = vst.msk [vmem:[%s2078] ss:$8 sm:$0x0] %vm745, %v2027
  %s2081 = scalar_lea.vmem %s7, 292
  %2082 = vst.msk [vmem:[%s2081] ss:$8 sm:$0x7] %vm745, %v2010
  %2083 = vst.msk [vmem:[%s2081] ss:$8 sm:$0x0] %vm745, %v2010
  %s2084 = scalar_lea.vmem %s7, 316
  %2085 = vst.msk [vmem:[%s2084] ss:$8 sm:$0x7] %vm745, %v2024
  %2086 = vst.msk [vmem:[%s2084] ss:$8 sm:$0x0] %vm745, %v2024
  %s2087 = scalar_lea.vmem %s7, 340
  %2088 = vst.msk [vmem:[%s2087] ss:$8 sm:$0x7] %vm745, %v2026
  %2089 = vst.msk [vmem:[%s2087] ss:$8 sm:$0x0] %vm745, %v2026
  %s2090 = scalar_lea.vmem %s7, 364
  %2091 = vst.msk [vmem:[%s2090] ss:$8 sm:$0x7] %vm745, %v2028
  %2092 = vst.msk [vmem:[%s2090] ss:$8 sm:$0x0] %vm745, %v2028
  %s2093 = scalar_lea.vmem %s3, 5
  %v2094 = vld [vmem:[%s2093] ss:$8 sm:$0x3]
  %v2096 = vlaneseq
  %v2097 = vshrl.u32 %v2096, 7
  %v2098 = vsub.s32 0, %v2097
  %v2099 = vrot.slane %v2094, %v2098
  %v2100 = vlaneseq
  %v2101 = vshrl.u32 %v2100, 7
  %v2102 = vsub.s32 1, %v2101
  %v2103 = vrot.slane %v2094, %v2102
  %v2106 = vadd.f32 %v97, %v2099
  %v2107 = vadd.f32 %v99, %v2103
  %v2108 = vadd.f32 %v101, %v2099
  %v2109 = vadd.f32 %v103, %v2103
  %v2110 = vmul.f32 %v192, %v2106
  %v2111 = vmul.f32 %v192, %v2107
  %v2112 = vmul.f32 %v197, %v2108
  %v2113 = vmul.f32 %v197, %v2109
  %v2114 = vadd.f32 %v2110, %v207
  %v2115 = vadd.f32 %v2111, %v211
  %v2116 = vadd.f32 %v2112, %v207
  %v2117 = vadd.f32 %v2113, %v211
  %v2118 = vmax.f32 %v2114, 0.0
  %v2119 = vmax.f32 %v2115, 0.0
  %v2120 = vmax.f32 %v2116, 0.0
  %v2121 = vmax.f32 %v2117, 0.0
  %v2122 = vpack.c.bf16 %v2120, %v2118
  %v2123 = vpack.c.bf16 %v2121, %v2119
  %2124 = vmatprep.subr.bf16.mxu0 %v401
  %2125 = vmatpush1.bf16.msra.mxu0 %v400
  %2126 = vmatprep.subr.bf16.mxu0 %v404
  %2127 = vmatpush1.bf16.msra.mxu0 %v403
  %2128 = vmatprep.subr.bf16.mxu0 %v407
  %2129 = vmatpush1.bf16.msra.mxu0 %v406
  %2130 = vmatprep.subr.bf16.mxu0 %v410
  %2131 = vmatpush1.bf16.msra.mxu0 %v409
  %2132 = vmatprep.subr.bf16.mxu0 %v413
  %2133 = vmatpush1.bf16.msra.mxu0 %v412
  %2134 = vmatprep.subr.bf16.mxu0 %v416
  %2135 = vmatpush1.bf16.msra.mxu0 %v415
  %2136 = vmatprep.subr.bf16.mxu0 %v419
  %2137 = vmatpush1.bf16.msra.mxu0 %v418
  %2138 = vmatprep.subr.bf16.mxu0 %v422
  %2139 = vmatpush1.bf16.msra.mxu0 %v421
  %2140 = vmatprep.subr.bf16.mxu0 %v425
  %2141 = vmatpush1.bf16.msra.mxu0 %v424
  %2142 = vmatprep.subr.bf16.mxu0 %v428
  %2143 = vmatpush1.bf16.msra.mxu0 %v427
  %2144 = vmatprep.subr.bf16.mxu0 %v431
  %2145 = vmatpush1.bf16.msra.mxu0 %v430
  %2146 = vmatprep.subr.bf16.mxu0 %v434
  %2147 = vmatpush1.bf16.msra.mxu0 %v433
  %2148 = vmatprep.subr.bf16.mxu0 %v437
  %2149 = vmatpush1.bf16.msra.mxu0 %v436
  %2150 = vmatprep.subr.bf16.mxu0 %v440
  %2151 = vmatpush1.bf16.msra.mxu0 %v439
  %2152 = vmatprep.subr.bf16.mxu0 %v443
  %2153 = vmatpush1.bf16.msra.mxu0 %v442
  %2154 = vmatprep.subr.bf16.mxu0 %v446
  %2155 = vmatpush1.bf16.msra.mxu0 %v445
  %2156 = vmatprep.mubr.bf16.mxu0 %v2123
  %2157 = vmatmul.mubr.bf16.gmra.mrb[0].mxu0 %v2122
  %v2158 = vpop.f32.mrb[0].mxu0
  %v2159 = vadd.f32 %v228, %v2158
  %v2160 = vpop.f32.mrb[0].mxu0
  %v2161 = vadd.f32 %v232, %v2160
  %v2162 = vpop.f32.mrb[0].mxu0
  %v2163 = vadd.f32 %v228, %v2162
  %v2164 = vpop.f32.mrb[0].mxu0
  %v2165 = vadd.f32 %v232, %v2164
  %2166 = vdwg.mxu0
  %2167 = vmatprep.subr.bf16.mxu0 0
  %2168 = vmatpush1.bf16.msra.mxu0 %v402
  %2169 = vmatprep.subr.bf16.mxu0 0
  %2170 = vmatpush1.bf16.msra.mxu0 %v405
  %2171 = vmatprep.subr.bf16.mxu0 0
  %2172 = vmatpush1.bf16.msra.mxu0 %v408
  %2173 = vmatprep.subr.bf16.mxu0 0
  %2174 = vmatpush1.bf16.msra.mxu0 %v411
  %2175 = vmatprep.subr.bf16.mxu0 0
  %2176 = vmatpush1.bf16.msra.mxu0 %v414
  %2177 = vmatprep.subr.bf16.mxu0 0
  %2178 = vmatpush1.bf16.msra.mxu0 %v417
  %2179 = vmatprep.subr.bf16.mxu0 0
  %2180 = vmatpush1.bf16.msra.mxu0 %v420
  %2181 = vmatprep.subr.bf16.mxu0 0
  %2182 = vmatpush1.bf16.msra.mxu0 %v423
  %2183 = vmatprep.subr.bf16.mxu0 0
  %2184 = vmatpush1.bf16.msra.mxu0 %v426
  %2185 = vmatprep.subr.bf16.mxu0 0
  %2186 = vmatpush1.bf16.msra.mxu0 %v429
  %2187 = vmatprep.subr.bf16.mxu0 0
  %2188 = vmatpush1.bf16.msra.mxu0 %v432
  %2189 = vmatprep.subr.bf16.mxu0 0
  %2190 = vmatpush1.bf16.msra.mxu0 %v435
  %2191 = vmatprep.subr.bf16.mxu0 0
  %2192 = vmatpush1.bf16.msra.mxu0 %v438
  %2193 = vmatprep.subr.bf16.mxu0 0
  %2194 = vmatpush1.bf16.msra.mxu0 %v441
  %2195 = vmatprep.subr.bf16.mxu0 0
  %2196 = vmatpush1.bf16.msra.mxu0 %v444
  %2197 = vmatprep.subr.bf16.mxu0 0
  %2198 = vmatpush1.bf16.msra.mxu0 %v447
  %2199 = vmatprep.mubr.bf16.mxu0 %v2123
  %2200 = vmatmul.mubr.bf16.gmra.mrb[0].mxu0 %v2122
  %v2201 = vpop.f32.mrb[0].mxu0
  %v2202 = vadd.f32 %v236, %v2201
  %v2203 = vpop.f32.mrb[0].mxu0
  %v2204 = vpop.f32.mrb[0].mxu0
  %v2205 = vadd.f32 %v236, %v2204
  %v2206 = vpop.f32.mrb[0].mxu0
  %2207 = vdwg.mxu0
  %v2208 = vmax.f32 %v2159, 0.0
  %v2209 = vmax.f32 %v2161, 0.0
  %v2210 = vmax.f32 %v2202, 0.0
  %v2211 = vmax.f32 %v2163, 0.0
  %v2212 = vmax.f32 %v2165, 0.0
  %v2213 = vmax.f32 %v2205, 0.0
  %v2220 = vcombine.low %v2208, %v2209
  %v2221 = vcombine.high %v2208, %v2209
  %v2222 = vcombine.high %v2210, %v2210
  %v2224 = vunpack.c.l.s4 1966171168
  %v2225 = vunpack.c.0.s8 %v2224
  %v2226 = vlaneseq
  %v2227 = vshrl.u32 %v2226, 7
  %v2228 = vsub.s32 %v2225, %v2227
  %v2229 = vrot.slane %v2220, %v2228
  %v2231 = vunpack.c.l.s4 1966171168
  %v2232 = vunpack.c.0.s8 %v2231
  %v2233 = vlaneseq
  %v2234 = vshrl.u32 %v2233, 7
  %v2235 = vsub.s32 %v2232, %v2234
  %v2236 = vrot.slane %v2221, %v2235
  %v2238 = vunpack.c.l.s4 1966171168
  %v2239 = vunpack.c.0.s8 %v2238
  %v2240 = vlaneseq
  %v2241 = vshrl.u32 %v2240, 7
  %v2242 = vsub.s32 %v2239, %v2241
  %v2243 = vrot.slane %v2210, %v2242
  %v2245 = vunpack.c.l.s4 1966171168
  %v2246 = vunpack.c.0.s8 %v2245
  %v2247 = vlaneseq
  %v2248 = vshrl.u32 %v2247, 7
  %v2249 = vsub.s32 %v2246, %v2248
  %v2250 = vrot.slane %v2222, %v2249
  %v2251 = vcombine.low %v2229, %v2243
  %v2252 = vcombine.high %v2229, %v2243
  %v2253 = vcombine.low %v2236, %v2250
  %v2254 = vcombine.high %v2236, %v2250
  %v2256 = vunpack.c.l.s4 1966171168
  %v2257 = vunpack.c.0.s8 %v2256
  %v2258 = vlaneseq
  %v2259 = vshrl.u32 %v2258, 7
  %v2260 = vsub.s32 %v2257, %v2259
  %v2261 = vrot.slane %v2251, %v2260
  %v2263 = vunpack.c.l.s4 1966171168
  %v2264 = vunpack.c.0.s8 %v2263
  %v2265 = vlaneseq
  %v2266 = vshrl.u32 %v2265, 7
  %v2267 = vsub.s32 %v2264, %v2266
  %v2268 = vrot.slane %v2253, %v2267
  %v2270 = vunpack.c.l.s4 1966171168
  %v2271 = vunpack.c.0.s8 %v2270
  %v2272 = vlaneseq
  %v2273 = vshrl.u32 %v2272, 7
  %v2274 = vsub.s32 %v2271, %v2273
  %v2275 = vrot.slane %v2252, %v2274
  %v2277 = vunpack.c.l.s4 1966171168
  %v2278 = vunpack.c.0.s8 %v2277
  %v2279 = vlaneseq
  %v2280 = vshrl.u32 %v2279, 7
  %v2281 = vsub.s32 %v2278, %v2280
  %v2282 = vrot.slane %v2254, %v2281
  %v2283 = vcombine.high %v2261, %v2261
  %v2284 = vcombine.high %v2268, %v2268
  %v2285 = vcombine.high %v2275, %v2275
  %v2286 = vcombine.high %v2282, %v2282
  %v2287 = vcombine.low %v2211, %v2212
  %v2288 = vcombine.high %v2211, %v2212
  %v2289 = vcombine.high %v2213, %v2213
  %v2291 = vunpack.c.l.s4 1966171168
  %v2292 = vunpack.c.0.s8 %v2291
  %v2293 = vlaneseq
  %v2294 = vshrl.u32 %v2293, 7
  %v2295 = vsub.s32 %v2292, %v2294
  %v2296 = vrot.slane %v2287, %v2295
  %v2298 = vunpack.c.l.s4 1966171168
  %v2299 = vunpack.c.0.s8 %v2298
  %v2300 = vlaneseq
  %v2301 = vshrl.u32 %v2300, 7
  %v2302 = vsub.s32 %v2299, %v2301
  %v2303 = vrot.slane %v2288, %v2302
  %v2305 = vunpack.c.l.s4 1966171168
  %v2306 = vunpack.c.0.s8 %v2305
  %v2307 = vlaneseq
  %v2308 = vshrl.u32 %v2307, 7
  %v2309 = vsub.s32 %v2306, %v2308
  %v2310 = vrot.slane %v2213, %v2309
  %v2312 = vunpack.c.l.s4 1966171168
  %v2313 = vunpack.c.0.s8 %v2312
  %v2314 = vlaneseq
  %v2315 = vshrl.u32 %v2314, 7
  %v2316 = vsub.s32 %v2313, %v2315
  %v2317 = vrot.slane %v2289, %v2316
  %v2318 = vcombine.low %v2296, %v2310
  %v2319 = vcombine.high %v2296, %v2310
  %v2320 = vcombine.low %v2303, %v2317
  %v2321 = vcombine.high %v2303, %v2317
  %v2323 = vunpack.c.l.s4 1966171168
  %v2324 = vunpack.c.0.s8 %v2323
  %v2325 = vlaneseq
  %v2326 = vshrl.u32 %v2325, 7
  %v2327 = vsub.s32 %v2324, %v2326
  %v2328 = vrot.slane %v2318, %v2327
  %v2330 = vunpack.c.l.s4 1966171168
  %v2331 = vunpack.c.0.s8 %v2330
  %v2332 = vlaneseq
  %v2333 = vshrl.u32 %v2332, 7
  %v2334 = vsub.s32 %v2331, %v2333
  %v2335 = vrot.slane %v2320, %v2334
  %v2337 = vunpack.c.l.s4 1966171168
  %v2338 = vunpack.c.0.s8 %v2337
  %v2339 = vlaneseq
  %v2340 = vshrl.u32 %v2339, 7
  %v2341 = vsub.s32 %v2338, %v2340
  %v2342 = vrot.slane %v2319, %v2341
  %v2344 = vunpack.c.l.s4 1966171168
  %v2345 = vunpack.c.0.s8 %v2344
  %v2346 = vlaneseq
  %v2347 = vshrl.u32 %v2346, 7
  %v2348 = vsub.s32 %v2345, %v2347
  %v2349 = vrot.slane %v2321, %v2348
  %v2350 = vcombine.high %v2328, %v2328
  %v2351 = vcombine.high %v2335, %v2335
  %v2352 = vcombine.high %v2342, %v2342
  %v2353 = vcombine.high %v2349, %v2349
  %s2370 = scalar_lea.vmem %s7, 5
  %2371 = vst.msk [vmem:[%s2370] ss:$8 sm:$0x7] %vm745, %v2261
  %2372 = vst.msk [vmem:[%s2370] ss:$8 sm:$0x0] %vm745, %v2261
  %s2373 = scalar_lea.vmem %s7, 29
  %2374 = vst.msk [vmem:[%s2373] ss:$8 sm:$0x7] %vm745, %v2275
  %2375 = vst.msk [vmem:[%s2373] ss:$8 sm:$0x0] %vm745, %v2275
  %s2376 = scalar_lea.vmem %s7, 53
  %2377 = vst.msk [vmem:[%s2376] ss:$8 sm:$0x7] %vm745, %v2283
  %2378 = vst.msk [vmem:[%s2376] ss:$8 sm:$0x0] %vm745, %v2283
  %s2379 = scalar_lea.vmem %s7, 77
  %2380 = vst.msk [vmem:[%s2379] ss:$8 sm:$0x7] %vm745, %v2285
  %2381 = vst.msk [vmem:[%s2379] ss:$8 sm:$0x0] %vm745, %v2285
  %s2382 = scalar_lea.vmem %s7, 101
  %2383 = vst.msk [vmem:[%s2382] ss:$8 sm:$0x7] %vm745, %v2268
  %2384 = vst.msk [vmem:[%s2382] ss:$8 sm:$0x0] %vm745, %v2268
  %s2385 = scalar_lea.vmem %s7, 125
  %2386 = vst.msk [vmem:[%s2385] ss:$8 sm:$0x7] %vm745, %v2282
  %2387 = vst.msk [vmem:[%s2385] ss:$8 sm:$0x0] %vm745, %v2282
  %s2388 = scalar_lea.vmem %s7, 149
  %2389 = vst.msk [vmem:[%s2388] ss:$8 sm:$0x7] %vm745, %v2284
  %2390 = vst.msk [vmem:[%s2388] ss:$8 sm:$0x0] %vm745, %v2284
  %s2391 = scalar_lea.vmem %s7, 173
  %2392 = vst.msk [vmem:[%s2391] ss:$8 sm:$0x7] %vm745, %v2286
  %2393 = vst.msk [vmem:[%s2391] ss:$8 sm:$0x0] %vm745, %v2286
  %s2394 = scalar_lea.vmem %s7, 197
  %2395 = vst.msk [vmem:[%s2394] ss:$8 sm:$0x7] %vm745, %v2328
  %2396 = vst.msk [vmem:[%s2394] ss:$8 sm:$0x0] %vm745, %v2328
  %s2397 = scalar_lea.vmem %s7, 221
  %2398 = vst.msk [vmem:[%s2397] ss:$8 sm:$0x7] %vm745, %v2342
  %2399 = vst.msk [vmem:[%s2397] ss:$8 sm:$0x0] %vm745, %v2342
  %s2400 = scalar_lea.vmem %s7, 245
  %2401 = vst.msk [vmem:[%s2400] ss:$8 sm:$0x7] %vm745, %v2350
  %2402 = vst.msk [vmem:[%s2400] ss:$8 sm:$0x0] %vm745, %v2350
  %s2403 = scalar_lea.vmem %s7, 269
  %2404 = vst.msk [vmem:[%s2403] ss:$8 sm:$0x7] %vm745, %v2352
  %2405 = vst.msk [vmem:[%s2403] ss:$8 sm:$0x0] %vm745, %v2352
  %s2406 = scalar_lea.vmem %s7, 293
  %2407 = vst.msk [vmem:[%s2406] ss:$8 sm:$0x7] %vm745, %v2335
  %2408 = vst.msk [vmem:[%s2406] ss:$8 sm:$0x0] %vm745, %v2335
  %s2409 = scalar_lea.vmem %s7, 317
  %2410 = vst.msk [vmem:[%s2409] ss:$8 sm:$0x7] %vm745, %v2349
  %2411 = vst.msk [vmem:[%s2409] ss:$8 sm:$0x0] %vm745, %v2349
  %s2412 = scalar_lea.vmem %s7, 341
  %2413 = vst.msk [vmem:[%s2412] ss:$8 sm:$0x7] %vm745, %v2351
  %2414 = vst.msk [vmem:[%s2412] ss:$8 sm:$0x0] %vm745, %v2351
  %s2415 = scalar_lea.vmem %s7, 365
  %2416 = vst.msk [vmem:[%s2415] ss:$8 sm:$0x7] %vm745, %v2353
  %2417 = vst.msk [vmem:[%s2415] ss:$8 sm:$0x0] %vm745, %v2353
  // Predicated region
  $region30: #{decoder_forward.1} parent=0 // pred_check
    _
  $region31: #{decoder_forward.1} parent=0 // pred_check_branch
    %2419 = sbr.rel (0) target = $region33
  $region32: #{decoder_forward.1} parent=0 // pred_region
    _
  $region33: #{decoder_forward.1} parent=0 // pred_fallthru
    _
  // Predicated region
  $region34: #{decoder_forward.1} parent=0 // pred_check
    _
  $region35: #{decoder_forward.1} parent=0 // pred_check_branch
    %2421 = sbr.rel (0) target = $region37
  $region36: #{decoder_forward.1} parent=0 // pred_region
    _
  $region37: #{decoder_forward.1} parent=0 // pred_fallthru
    _

</llo_original>
